<compile_context>
chip_gen: v6e
topology: v6e:2x2x1
jax: 0.10.0
libtpu: 0.0.40
codegen_flags: <defaults>
</compile_context>

<pallas_src>
import math
import jax
import jax.numpy as jnp
from jax import lax
from jax.experimental import pallas as pl
from jax.experimental.pallas import tpu as pltpu


def _largest_divisor_leq(n, cap):
    c = max(1, min(n, cap))
    while n % c:
        c -= 1
    return c


# ---------------------------------------------------------------------------
# Kernel 1: batched encode (parallel over row tiles).
#   obs = cos(x @ rbf_wT + rbf_b) @ (scale * emb_wT) + emb_b
# (scale is folded into emb_wT in the wrapper)
# ---------------------------------------------------------------------------
def _encode_kernel(x_ref, rbf_wT_ref, rbf_b_ref, emb_wT_ref, emb_b_ref, obs_ref):
    enc = jnp.cos(jnp.dot(x_ref[...], rbf_wT_ref[...],
                          preferred_element_type=jnp.float32) + rbf_b_ref[...])
    obs_ref[...] = (jnp.dot(enc, emb_wT_ref[...],
                            preferred_element_type=jnp.float32) + emb_b_ref[...])


# ---------------------------------------------------------------------------
# Kernel 2: fused recurrence + decode, grid over time chunks ("arbitrary").
#
# Per chunk (all MXU work is OFF the serial dependency chain):
#   bias[(t,j), k]      = sum_m obs[(t,j), m] * wfe_b[k*nhid+m]
#   C[k, (t,j), h]      = sum_m obs[(t,j), m] * wfe_w[k*nhid+m, h]
# Serial loop over t (VPU multiply + XLU lane-reduce + tiny transpose + EUP
# rsqrt only):
#   raw[j,k] = sum_h C[k,(t,j),h] * b[j,h] + bias[(t,j),k]
#   b        = raw / ||raw||_2 (per row)
# Epilogue (MXU, idle during the loop):
#   out[(t,j), :] = b_t[j] @ dec_wT + dec_b
# ---------------------------------------------------------------------------
def _make_recurrence_kernel(tchunk, bsz_p, nhid):
    def kernel(b0_ref, obs_ref, w3_ref, wbT_ref, dw_ref, db_ref,
               out_ref, blast_ref,
               b_scr, c_scr, bias_scr, bchunk_scr):
        # carried hidden state lives in VMEM scratch across grid steps
        @pl.when(pl.program_id(0) == 0)
        def _init():
            b_scr[...] = b0_ref[...]

        obs = obs_ref[...]                                   # (tchunk*bsz_p, nhid) f32

        # chunk-level MXU work: W_FE_F bias term and obs-side contraction.
        bias_scr[...] = jnp.dot(obs, wbT_ref[...],
                                preferred_element_type=jnp.float32)

        def fill(k, carry):
            # C[k] = obs @ wfe_w[k*nhid:(k+1)*nhid, :]   -> (rows, nhid_h)
            c_scr[k] = jnp.dot(obs, w3_ref[k], preferred_element_type=jnp.float32)
            return carry
        lax.fori_loop(0, nhid, fill, 0, unroll=min(nhid, 8))

        # serial recurrence (cheap per-step work only).
        def step(t, carry):
            row0 = pl.multiple_of(t * bsz_p, 8)              # tile-aligned row offset
            ct = c_scr[:, pl.ds(row0, bsz_p), :]             # (nhid_k, bsz_p, nhid_h)
            b = b_scr[...]                                   # (bsz_p, nhid_h)
            red = jnp.sum(ct * b[None, :, :], axis=2)        # (nhid_k, bsz_p)
            raw = jnp.transpose(red) + bias_scr[pl.ds(row0, bsz_p), :]  # (bsz_p, nhid_k)
            bn = raw * lax.rsqrt(jnp.sum(raw * raw, axis=1, keepdims=True))
            b_scr[...] = bn
            bchunk_scr[pl.ds(row0, bsz_p), :] = bn
            return carry
        lax.fori_loop(0, tchunk, step, 0, unroll=min(tchunk, 8))

        # fused decoder for the whole chunk (lane-dense 2D output slab).
        out_ref[...] = (jnp.dot(bchunk_scr[...], dw_ref[...],
                                preferred_element_type=jnp.float32)
                        + db_ref[...]).astype(out_ref.dtype)
        blast_ref[...] = b_scr[...]

    return kernel


def psrnn_forward(x, b0, params, *, time_chunk_cap=8, row_tile_cap=256):
    bptt, bsz, ntoken = x.shape
    ninp = params["rbf_w"].shape[0]
    nhid = params["emb_w"].shape[0]
    f32 = jnp.float32
    scale = math.sqrt(2.0) / math.sqrt(ninp)

    # ---- parameter plumbing (plain JAX, constant folded) ----
    rbf_wT = params["rbf_w"].T.astype(f32)                      # (ntoken, ninp)
    rbf_b = params["rbf_b"].reshape(1, ninp).astype(f32)
    emb_wT = (params["emb_w"].T * scale).astype(f32)            # scale folded in
    emb_b = params["emb_b"].reshape(1, nhid).astype(f32)
    # wfe_w is (nhid*nhid, nhid) indexed [k*nhid + m, h]  ->  w3[k, m, h]
    w3 = params["wfe_w"].reshape(nhid, nhid, nhid).astype(f32)
    wfe_bT = params["wfe_b"].reshape(nhid, nhid).T.astype(f32)  # [m, k]
    dec_wT = params["dec_w"].T.astype(f32)                      # (nhid, ntoken)
    dec_b = params["dec_b"].reshape(1, ntoken).astype(f32)

    # ---- pad batch to a multiple of 8 (sublane tile); padded rows are inert
    # (the recurrence and decode are strictly per-row) and dropped at the end.
    bsz_p = max(8, ((bsz + 7) // 8) * 8)
    x_p = jnp.pad(x.astype(f32), ((0, 0), (0, bsz_p - bsz), (0, 0)))
    b0_p = jnp.pad(b0.astype(f32), ((0, bsz_p - bsz), (0, 0)), constant_values=1.0)

    Rp = bptt * bsz_p
    x2 = x_p.reshape(Rp, ntoken)

    # ---- encode: parallel over row tiles ----
    rtile = bsz_p * _largest_divisor_leq(bptt, max(1, row_tile_cap // bsz_p))
    obs = pl.pallas_call(
        _encode_kernel,
        grid=(Rp // rtile,),
        in_specs=[pl.BlockSpec((rtile, ntoken), lambda i: (i, 0)),
                  pl.BlockSpec((ntoken, ninp), lambda i: (0, 0)),
                  pl.BlockSpec((1, ninp), lambda i: (0, 0)),
                  pl.BlockSpec((ninp, nhid), lambda i: (0, 0)),
                  pl.BlockSpec((1, nhid), lambda i: (0, 0))],
        out_specs=pl.BlockSpec((rtile, nhid), lambda i: (i, 0)),
        out_shape=jax.ShapeDtypeStruct((Rp, nhid), f32),
        compiler_params=pltpu.CompilerParams(dimension_semantics=("parallel",)),
    )(x2, rbf_wT, rbf_b, emb_wT, emb_b)

    # ---- fused recurrence + decode over time chunks ----
    tchunk = _largest_divisor_leq(bptt, time_chunk_cap)
    nchunks = bptt // tchunk
    rows_per_chunk = tchunk * bsz_p

    out2, b_last_p = pl.pallas_call(
        _make_recurrence_kernel(tchunk, bsz_p, nhid),
        grid=(nchunks,),
        in_specs=[pl.BlockSpec((bsz_p, nhid), lambda c: (0, 0)),            # b0
                  pl.BlockSpec((rows_per_chunk, nhid), lambda c: (c, 0)),   # obs chunk
                  pl.BlockSpec((nhid, nhid, nhid), lambda c: (0, 0, 0)),    # w3 (resident)
                  pl.BlockSpec((nhid, nhid), lambda c: (0, 0)),             # wfe_bT
                  pl.BlockSpec((nhid, ntoken), lambda c: (0, 0)),           # dec_wT
                  pl.BlockSpec((1, ntoken), lambda c: (0, 0))],             # dec_b
        out_specs=[pl.BlockSpec((rows_per_chunk, ntoken), lambda c: (c, 0)),
                   pl.BlockSpec((bsz_p, nhid), lambda c: (0, 0))],
        out_shape=[jax.ShapeDtypeStruct((Rp, ntoken), f32),
                   jax.ShapeDtypeStruct((bsz_p, nhid), f32)],
        scratch_shapes=[pltpu.VMEM((bsz_p, nhid), f32),                     # carried state
                        pltpu.VMEM((nhid, rows_per_chunk, nhid), f32),      # C chunk [k, row, h]
                        pltpu.VMEM((rows_per_chunk, nhid), f32),            # bias chunk
                        pltpu.VMEM((rows_per_chunk, nhid), f32)],           # b values of chunk
        compiler_params=pltpu.CompilerParams(
            dimension_semantics=("arbitrary",),
            vmem_limit_bytes=48 * 1024 * 1024),
    )(b0_p, obs, w3, wfe_bT, dec_wT, dec_b)

    out = out2.reshape(bptt, bsz_p, ntoken)[:, :bsz, :].astype(x.dtype)
    b_last = b_last_p[:bsz]
    return out, b_last


def psrnn_reference(x, b0, params):
    """Pure-JAX mirror of the PyTorch forward (loops and all)."""
    bptt, bsz, ntoken = x.shape
    ninp = params["rbf_w"].shape[0]
    nhid = params["emb_w"].shape[0]
    xf = x.reshape(bptt * bsz, ntoken)
    enc = jnp.cos(xf @ params["rbf_w"].T + params["rbf_b"]) * (math.sqrt(2.0) / math.sqrt(ninp))
    obs = (enc @ params["emb_w"].T + params["emb_b"]).reshape(bptt, bsz, nhid)
    b = b0
    outs = []
    for i in range(bptt):
        W = (b @ params["wfe_w"].T + params["wfe_b"]).reshape(bsz * nhid, nhid)
        bs = []
        for j in range(bsz):
            Wj = W[j * nhid:(j + 1) * nhid, :]
            bj = (Wj @ obs[i, j][:, None]).T                     # (1, nhid)
            bj = bj / jnp.sqrt(bj @ bj.T)
            bs.append(bj)
        b = jnp.concatenate(bs, axis=0)
        outs.append((b @ params["dec_w"].T + params["dec_b"])[None])
    return jnp.concatenate(outs, axis=0), b


if __name__ == "__main__":
    bptt, bsz = 16, 2
    ntoken, ninp, nhid = 16, 32, 32

    key = jax.random.PRNGKey(0)
    ks = jax.random.split(key, 10)
    u = lambda k, shape: jax.random.uniform(k, shape, jnp.float32, -0.1, 0.1)
    params = dict(
        rbf_w=u(ks[0], (ninp, ntoken)), rbf_b=u(ks[1], (ninp,)),
        emb_w=u(ks[2], (nhid, ninp)),   emb_b=u(ks[3], (nhid,)),
        wfe_w=u(ks[4], (nhid * nhid, nhid)), wfe_b=u(ks[5], (nhid * nhid,)),
        dec_w=u(ks[6], (ntoken, nhid)), dec_b=u(ks[7], (ntoken,)),
    )
    x = jax.random.normal(ks[8], (bptt, bsz, ntoken), jnp.float32)
    b0 = jnp.ones((bsz, nhid), jnp.float32)   # module's init_hidden: ones(bsz,1) @ x_1

    out, b_last = psrnn_forward(x, b0, params)
    jax.block_until_ready((out, b_last))

    out_ref, b_ref = psrnn_reference(x, b0, params)
    assert out.shape == (bptt, bsz, ntoken) and b_last.shape == (bsz, nhid)
    assert jnp.allclose(out, out_ref, atol=1e-4, rtol=1e-4), \
        float(jnp.max(jnp.abs(out - out_ref)))
    assert jnp.allclose(b_last, b_ref, atol=1e-4, rtol=1e-4), \
        float(jnp.max(jnp.abs(b_last - b_ref)))
    print("KERNEL_OK")
</pallas_src>

<mosaic_0001>
module attributes {stable_mosaic.version = 11 : i64} {
  func.func @_encode_kernel(%arg0: i32, %arg1: memref<128x16xf32, #tpu.memory_space<vmem>>, %arg2: memref<16x32xf32, #tpu.memory_space<vmem>>, %arg3: memref<1x32xf32, #tpu.memory_space<vmem>>, %arg4: memref<32x32xf32, #tpu.memory_space<vmem>>, %arg5: memref<1x32xf32, #tpu.memory_space<vmem>>, %arg6: memref<128x32xf32, #tpu.memory_space<vmem>>) attributes {dimension_semantics = [#tpu.dimension_semantics<parallel>], iteration_bounds = array<i64: 1>, scalar_prefetch = 0 : i64, scratch_operands = 0 : i64, tpu.core_type = #tpu.core_type<tc>, window_params = [{transform_indices = @transform_0, window_bounds = array<i64: 128, 16>}, {pipeline_mode = #tpu.pipeline_mode<synchronous>, transform_indices = @transform_1, window_bounds = array<i64: 16, 32>}, {pipeline_mode = #tpu.pipeline_mode<synchronous>, transform_indices = @transform_2, window_bounds = array<i64: 1, 32>}, {pipeline_mode = #tpu.pipeline_mode<synchronous>, transform_indices = @transform_3, window_bounds = array<i64: 32, 32>}, {pipeline_mode = #tpu.pipeline_mode<synchronous>, transform_indices = @transform_4, window_bounds = array<i64: 1, 32>}, {transform_indices = @transform_5, window_bounds = array<i64: 128, 32>}]} {
    %c0 = arith.constant 0 : index
    %c0_0 = arith.constant 0 : index
    %0 = vector.load %arg1[%c0, %c0_0] : memref<128x16xf32, #tpu.memory_space<vmem>>, vector<128x16xf32>
    %c0_1 = arith.constant 0 : index
    %c0_2 = arith.constant 0 : index
    %1 = vector.load %arg2[%c0_1, %c0_2] : memref<16x32xf32, #tpu.memory_space<vmem>>, vector<16x32xf32>
    %cst = arith.constant dense<0.000000e+00> : vector<128x32xf32>
    %2 = tpu.matmul %0, %1, %cst {dimension_numbers = #tpu.dot_dimension_numbers<[1], [0], [0], [1], [0, 0, 1, 1], [], []>} : vector<128x16xf32>, vector<16x32xf32>, vector<128x32xf32> -> vector<128x32xf32>
    %c0_3 = arith.constant 0 : index
    %c0_4 = arith.constant 0 : index
    %3 = vector.load %arg3[%c0_3, %c0_4] : memref<1x32xf32, #tpu.memory_space<vmem>>, vector<1x32xf32>
    %4 = vector.broadcast %3 : vector<1x32xf32> to vector<128x32xf32>
    %5 = arith.addf %2, %4 : vector<128x32xf32>
    %6 = math.cos %5 : vector<128x32xf32>
    %c0_5 = arith.constant 0 : index
    %c0_6 = arith.constant 0 : index
    %7 = vector.load %arg4[%c0_5, %c0_6] : memref<32x32xf32, #tpu.memory_space<vmem>>, vector<32x32xf32>
    %cst_7 = arith.constant dense<0.000000e+00> : vector<128x32xf32>
    %8 = tpu.matmul %6, %7, %cst_7 {dimension_numbers = #tpu.dot_dimension_numbers<[1], [0], [0], [1], [0, 0, 1, 1], [], []>} : vector<128x32xf32>, vector<32x32xf32>, vector<128x32xf32> -> vector<128x32xf32>
    %c0_8 = arith.constant 0 : index
    %c0_9 = arith.constant 0 : index
    %9 = vector.load %arg5[%c0_8, %c0_9] : memref<1x32xf32, #tpu.memory_space<vmem>>, vector<1x32xf32>
    %10 = vector.broadcast %9 : vector<1x32xf32> to vector<128x32xf32>
    %11 = arith.addf %8, %10 : vector<128x32xf32>
    %c0_10 = arith.constant 0 : index
    %c0_11 = arith.constant 0 : index
    %12 = vector.load %arg6[%c0_10, %c0_11] : memref<128x32xf32, #tpu.memory_space<vmem>>, vector<128x32xf32>
    tpu.vector_store %arg6[%c0_10, %c0_11], %11 {strides = array<i32>} : memref<128x32xf32, #tpu.memory_space<vmem>>, vector<128x32xf32>,
    return
  }
  func.func @transform_0(%arg0: i32) -> (i32, i32) {
    %c0_i32 = arith.constant 0 : i32
    %c0_i32_0 = arith.constant 0 : i32
    return %arg0, %c0_i32 : i32, i32
  }
  func.func @transform_1(%arg0: i32) -> (i32, i32) {
    %c0_i32 = arith.constant 0 : i32
    %c0_i32_0 = arith.constant 0 : i32
    %c0_i32_1 = arith.constant 0 : i32
    return %c0_i32, %c0_i32_0 : i32, i32
  }
  func.func @transform_2(%arg0: i32) -> (i32, i32) {
    %c0_i32 = arith.constant 0 : i32
    %c0_i32_0 = arith.constant 0 : i32
    %c0_i32_1 = arith.constant 0 : i32
    return %c0_i32, %c0_i32_0 : i32, i32
  }
  func.func @transform_3(%arg0: i32) -> (i32, i32) {
    %c0_i32 = arith.constant 0 : i32
    %c0_i32_0 = arith.constant 0 : i32
    %c0_i32_1 = arith.constant 0 : i32
    return %c0_i32, %c0_i32_0 : i32, i32
  }
  func.func @transform_4(%arg0: i32) -> (i32, i32) {
    %c0_i32 = arith.constant 0 : i32
    %c0_i32_0 = arith.constant 0 : i32
    %c0_i32_1 = arith.constant 0 : i32
    return %c0_i32, %c0_i32_0 : i32, i32
  }
  func.func @transform_5(%arg0: i32) -> (i32, i32) {
    %c0_i32 = arith.constant 0 : i32
    %c0_i32_0 = arith.constant 0 : i32
    return %arg0, %c0_i32 : i32, i32
  }
}

</mosaic_0001>

<llo_original>
// kernel: tpu_custom_call.1
$region0: #{tpu_custom_call.1}
  #allocation0 [shape = 'u32[]', space=smem, size = 0x4, offset = 0x4, fixed_abs, tag = 'smem constant byte address 0x4 - core index']
  #allocation1 [shape = 'u32[144,128]{1,0:T(1,128)}', space=vmem, size = 0x12000, scoped, tag = 'internal scratch']
  %s0 = inlined_call_operand.vmem [shape: f32[128,16], index: 0, kind: input, shape index: {}]
  %s1 = inlined_call_operand.vmem [shape: f32[16,32], index: 1, kind: input, shape index: {}]
  %s2 = inlined_call_operand.vmem [shape: f32[1,32], index: 2, kind: input, shape index: {}]
  %s3 = inlined_call_operand.vmem [shape: f32[32,32], index: 3, kind: input, shape index: {}]
  %s4 = inlined_call_operand.vmem [shape: f32[1,32], index: 4, kind: input, shape index: {}]
  %s5 = inlined_call_operand.vmem [shape: f32[128,32], index: 5, kind: output, shape index: {}]
  %s6 = sld [smem:[#allocation0]]
  $region30: #{tpu_custom_call.1} parent=0
    _
  %s8 = ssub.s32 1, %s6
  %s9 = scalar_select 0, %s8, %s6
  // Predicated region
  $region2: #{tpu_custom_call.1} parent=0 // pred_check
    _
  $region3: #{tpu_custom_call.1} parent=0 // pred_check_branch
    %11 = sbr.rel (0) target = $region5
  $region4: #{tpu_custom_call.1} parent=0 // pred_region
    _
  $region5: #{tpu_custom_call.1} parent=0 // pred_fallthru
    _
  // Predicated region
  $region6: #{tpu_custom_call.1} parent=0 // pred_check
    _
  $region7: #{tpu_custom_call.1} parent=0 // pred_check_branch
    %13 = sbr.rel (0) target = $region9
  $region8: #{tpu_custom_call.1} parent=0 // pred_region
    _
  $region9: #{tpu_custom_call.1} parent=0 // pred_fallthru
    _
  // Predicated region
  $region10: #{tpu_custom_call.1} parent=0 // pred_check
    _
  $region11: #{tpu_custom_call.1} parent=0 // pred_check_branch
    %15 = sbr.rel (0) target = $region13
  $region12: #{tpu_custom_call.1} parent=0 // pred_region
    _
  $region13: #{tpu_custom_call.1} parent=0 // pred_fallthru
    _
  // Predicated region
  $region14: #{tpu_custom_call.1} parent=0 // pred_check
    _
  $region15: #{tpu_custom_call.1} parent=0 // pred_check_branch
    %17 = sbr.rel (0) target = $region17
  $region16: #{tpu_custom_call.1} parent=0 // pred_region
    _
  $region17: #{tpu_custom_call.1} parent=0 // pred_fallthru
    _
  // Predicated region
  $region18: #{tpu_custom_call.1} parent=0 // pred_check
    _
  $region19: #{tpu_custom_call.1} parent=0 // pred_check_branch
    %19 = sbr.rel (0) target = $region21
  $region20: #{tpu_custom_call.1} parent=0 // pred_region
    _
  $region21: #{tpu_custom_call.1} parent=0 // pred_fallthru
    _
  %v20 = vld [vmem:[%s0] sm:$0xff]
  %v21 = vld [vmem:[%s0 + $0x8] sm:$0xff]
  %v22 = vld [vmem:[%s0 + $0x10] sm:$0xff]
  %v23 = vld [vmem:[%s0 + $0x18] sm:$0xff]
  %v24 = vld [vmem:[%s0 + $0x20] sm:$0xff]
  %v25 = vld [vmem:[%s0 + $0x28] sm:$0xff]
  %v26 = vld [vmem:[%s0 + $0x30] sm:$0xff]
  %v27 = vld [vmem:[%s0 + $0x38] sm:$0xff]
  %v28 = vld [vmem:[%s0 + $0x40] sm:$0xff]
  %v29 = vld [vmem:[%s0 + $0x48] sm:$0xff]
  %v30 = vld [vmem:[%s0 + $0x50] sm:$0xff]
  %v31 = vld [vmem:[%s0 + $0x58] sm:$0xff]
  %v32 = vld [vmem:[%s0 + $0x60] sm:$0xff]
  %v33 = vld [vmem:[%s0 + $0x68] sm:$0xff]
  %v34 = vld [vmem:[%s0 + $0x70] sm:$0xff]
  %v35 = vld [vmem:[%s0 + $0x78] sm:$0xff]
  %v36 = vld [vmem:[%s1] sm:$0xff]
  %v37 = vld [vmem:[%s1 + $0x8] sm:$0xff]
  %v38 = vld [vmem:[%s2] sm:$0x1]
  %v40 = vlaneseq
  %v41 = vshrl.u32 %v40, 7
  %v42 = vsub.s32 0, %v41
  %v43 = vrot.slane %v38, %v42
  %vm45 = vcmask 130048
  %v47 = vsel %vm45, %v20, 0
  %v50 = vsel %vm45, %v21, 0
  %v53 = vsel %vm45, %v22, 0
  %v56 = vsel %vm45, %v23, 0
  %v59 = vsel %vm45, %v24, 0
  %v62 = vsel %vm45, %v25, 0
  %v65 = vsel %vm45, %v26, 0
  %v68 = vsel %vm45, %v27, 0
  %v71 = vsel %vm45, %v28, 0
  %v74 = vsel %vm45, %v29, 0
  %v77 = vsel %vm45, %v30, 0
  %v80 = vsel %vm45, %v31, 0
  %v83 = vsel %vm45, %v32, 0
  %v86 = vsel %vm45, %v33, 0
  %v89 = vsel %vm45, %v34, 0
  %v92 = vsel %vm45, %v35, 0
  %94 = vmatprep.subr.mxu0 0.0
  %95 = vmatpush1.msra.mxu0 0.0
  %96 = vmatprep.subr.mxu0 0.0
  %97 = vmatpush1.msra.mxu0 0.0
  %98 = vmatprep.subr.mxu0 0.0
  %99 = vmatpush1.msra.mxu0 0.0
  %100 = vmatprep.subr.mxu0 0.0
  %101 = vmatpush1.msra.mxu0 0.0
  %102 = vmatprep.subr.mxu0 0.0
  %103 = vmatpush1.msra.mxu0 0.0
  %104 = vmatprep.subr.mxu0 0.0
  %105 = vmatpush1.msra.mxu0 0.0
  %106 = vmatprep.subr.mxu0 0.0
  %107 = vmatpush1.msra.mxu0 0.0
  %108 = vmatprep.subr.mxu0 0.0
  %109 = vmatpush1.msra.mxu0 0.0
  %110 = vmatprep.subr.mxu0 0.0
  %111 = vmatpush1.msra.mxu0 0.0
  %112 = vmatprep.subr.mxu0 0.0
  %113 = vmatpush1.msra.mxu0 0.0
  %114 = vmatprep.subr.mxu0 0.0
  %115 = vmatpush1.msra.mxu0 0.0
  %116 = vmatprep.subr.mxu0 0.0
  %117 = vmatpush1.msra.mxu0 0.0
  %118 = vmatprep.subr.mxu0 0.0
  %119 = vmatpush1.msra.mxu0 0.0
  %120 = vmatprep.subr.mxu0 0.0
  %121 = vmatpush1.msra.mxu0 0.0
  %122 = vmatprep.subr.mxu0 0.0
  %123 = vmatpush1.msra.mxu0 %v37
  %124 = vmatprep.subr.mxu0 0.0
  %125 = vmatpush1.msra.mxu0 %v36
  %126 = vmatprep.subr.mxu0 0.0
  %127 = vmatpush2.msra.mxu0 0.0
  %128 = vmatprep.subr.mxu0 0.0
  %129 = vmatpush2.msra.mxu0 0.0
  %130 = vmatprep.subr.mxu0 0.0
  %131 = vmatpush2.msra.mxu0 0.0
  %132 = vmatprep.subr.mxu0 0.0
  %133 = vmatpush2.msra.mxu0 0.0
  %134 = vmatprep.subr.mxu0 0.0
  %135 = vmatpush2.msra.mxu0 0.0
  %136 = vmatprep.subr.mxu0 0.0
  %137 = vmatpush2.msra.mxu0 0.0
  %138 = vmatprep.subr.mxu0 0.0
  %139 = vmatpush2.msra.mxu0 0.0
  %140 = vmatprep.subr.mxu0 0.0
  %141 = vmatpush2.msra.mxu0 0.0
  %142 = vmatprep.subr.mxu0 0.0
  %143 = vmatpush2.msra.mxu0 0.0
  %144 = vmatprep.subr.mxu0 0.0
  %145 = vmatpush2.msra.mxu0 0.0
  %146 = vmatprep.subr.mxu0 0.0
  %147 = vmatpush2.msra.mxu0 0.0
  %148 = vmatprep.subr.mxu0 0.0
  %149 = vmatpush2.msra.mxu0 0.0
  %150 = vmatprep.subr.mxu0 0.0
  %151 = vmatpush2.msra.mxu0 0.0
  %152 = vmatprep.subr.mxu0 0.0
  %153 = vmatpush2.msra.mxu0 0.0
  %154 = vmatprep.subr.mxu0 0.0
  %155 = vmatpush2.msra.mxu0 0.0
  %156 = vmatprep.subr.mxu0 0.0
  %157 = vmatpush2.msra.mxu0 0.0
  %158 = vmatprep.mubr.f32.mxu0 0.0
  %159 = vmatmul.mubr.f32.gmra.mxu0 %v47
  %v160 = vpop.f32.mrf.mxu0
  %v161 = vadd.f32 %v43, %v160
  %v162 = vpop.f32.mrf.mxu0
  %163 = vmatprep.mubr.f32.mxu0 0.0
  %164 = vmatmul.mubr.f32.gmra.mxu0 %v50
  %v165 = vpop.f32.mrf.mxu0
  %v166 = vadd.f32 %v43, %v165
  %v167 = vpop.f32.mrf.mxu0
  %168 = vmatprep.mubr.f32.mxu0 0.0
  %169 = vmatmul.mubr.f32.gmra.mxu0 %v53
  %v170 = vpop.f32.mrf.mxu0
  %v171 = vadd.f32 %v43, %v170
  %v172 = vpop.f32.mrf.mxu0
  %173 = vmatprep.mubr.f32.mxu0 0.0
  %174 = vmatmul.mubr.f32.gmra.mxu0 %v56
  %v175 = vpop.f32.mrf.mxu0
  %v176 = vadd.f32 %v43, %v175
  %v177 = vpop.f32.mrf.mxu0
  %178 = vmatprep.mubr.f32.mxu0 0.0
  %179 = vmatmul.mubr.f32.gmra.mxu0 %v59
  %v180 = vpop.f32.mrf.mxu0
  %v181 = vadd.f32 %v43, %v180
  %v182 = vpop.f32.mrf.mxu0
  %183 = vmatprep.mubr.f32.mxu0 0.0
  %184 = vmatmul.mubr.f32.gmra.mxu0 %v62
  %v185 = vpop.f32.mrf.mxu0
  %v186 = vadd.f32 %v43, %v185
  %v187 = vpop.f32.mrf.mxu0
  %188 = vmatprep.mubr.f32.mxu0 0.0
  %189 = vmatmul.mubr.f32.gmra.mxu0 %v65
  %v190 = vpop.f32.mrf.mxu0
  %v191 = vadd.f32 %v43, %v190
  %v192 = vpop.f32.mrf.mxu0
  %193 = vmatprep.mubr.f32.mxu0 0.0
  %194 = vmatmul.mubr.f32.gmra.mxu0 %v68
  %v195 = vpop.f32.mrf.mxu0
  %v196 = vadd.f32 %v43, %v195
  %v197 = vpop.f32.mrf.mxu0
  %198 = vmatprep.mubr.f32.mxu0 0.0
  %199 = vmatmul.mubr.f32.gmra.mxu0 %v71
  %v200 = vpop.f32.mrf.mxu0
  %v201 = vadd.f32 %v43, %v200
  %v202 = vpop.f32.mrf.mxu0
  %203 = vmatprep.mubr.f32.mxu0 0.0
  %204 = vmatmul.mubr.f32.gmra.mxu0 %v74
  %v205 = vpop.f32.mrf.mxu0
  %v206 = vadd.f32 %v43, %v205
  %v207 = vpop.f32.mrf.mxu0
  %208 = vmatprep.mubr.f32.mxu0 0.0
  %209 = vmatmul.mubr.f32.gmra.mxu0 %v77
  %v210 = vpop.f32.mrf.mxu0
  %v211 = vadd.f32 %v43, %v210
  %v212 = vpop.f32.mrf.mxu0
  %213 = vmatprep.mubr.f32.mxu0 0.0
  %214 = vmatmul.mubr.f32.gmra.mxu0 %v80
  %v215 = vpop.f32.mrf.mxu0
  %v216 = vadd.f32 %v43, %v215
  %v217 = vpop.f32.mrf.mxu0
  %218 = vmatprep.mubr.f32.mxu0 0.0
  %219 = vmatmul.mubr.f32.gmra.mxu0 %v83
  %v220 = vpop.f32.mrf.mxu0
  %v221 = vadd.f32 %v43, %v220
  %v222 = vpop.f32.mrf.mxu0
  %223 = vmatprep.mubr.f32.mxu0 0.0
  %224 = vmatmul.mubr.f32.gmra.mxu0 %v86
  %v225 = vpop.f32.mrf.mxu0
  %v226 = vadd.f32 %v43, %v225
  %v227 = vpop.f32.mrf.mxu0
  %228 = vmatprep.mubr.f32.mxu0 0.0
  %229 = vmatmul.mubr.f32.gmra.mxu0 %v89
  %v230 = vpop.f32.mrf.mxu0
  %v231 = vadd.f32 %v43, %v230
  %v232 = vpop.f32.mrf.mxu0
  %233 = vmatprep.mubr.f32.mxu0 0.0
  %234 = vmatmul.mubr.f32.gmra.mxu0 %v92
  %v235 = vpop.f32.mrf.mxu0
  %v236 = vadd.f32 %v43, %v235
  %v237 = vpop.f32.mrf.mxu0
  %238 = vdwg.mxu0
  %v239 = vand.u32 2147483647, %v161
  %vm240 = vcmp.le.f32.partialorder %v239, 0.7853982
  %vm241 = vcmp.lt.s32.totalorder %v161, 0
  %v242 = vand.u32 %v161, 2139095040
  %v243 = vshrl.u32 %v242, 23
  %v244 = vsub.s32 %v243, 127
  %v245 = vand.u32 2147483647, %v161
  %v246 = vand.u32 %v245, 8388607
  %v247 = vor.u32 %v246, 8388608
  %v248 = vsub.s32 0, %v247
  %v249 = vadd.s32 %v244, 1
  %vm250 = vcmp.gt.s32.totalorder %v249, 0
  %v251 = vsel %vm250, %v249, 0
  %v252 = vshrl.u32 %v251, 5
  %v253 = vand.u32 %v251, 31
  %v254 = vsub.s32 32, %v253
  %v255 = vshrl.u32 683565275, %v254
  %v256 = vshll.u32 683565275, %v253
  %v257 = vshrl.u32 2475754826, %v254
  %v258 = vor.u32 %v256, %v257
  %v259 = vshll.u32 2475754826, %v253
  %v260 = vshrl.u32 2131351028, %v254
  %v261 = vor.u32 %v259, %v260
  %v262 = vshll.u32 2131351028, %v253
  %v263 = vshrl.u32 2102212464, %v254
  %v264 = vor.u32 %v262, %v263
  %v265 = vshll.u32 2102212464, %v253
  %v266 = vshrl.u32 920167782, %v254
  %v267 = vor.u32 %v265, %v266
  %v268 = vshll.u32 920167782, %v253
  %v269 = vshrl.u32 1326507024, %v254
  %v270 = vor.u32 %v268, %v269
  %vm271 = vcmp.lt.s32.totalorder %v252, 1
  %vm272 = vcmp.lt.s32.totalorder %v252, 2
  %vm273 = vcmp.lt.s32.totalorder %v252, 3
  %vm274 = vcmp.lt.s32.totalorder %v252, 4
  %v275 = vsel %vm271, %v255, %v258
  %v276 = vsel %vm274, %v264, 2102212464
  %v277 = vsel %vm273, %v261, %v276
  %v278 = vsel %vm272, %v275, %v277
  %v279 = vsel %vm271, %v258, %v261
  %v280 = vsel %vm274, %v267, 920167782
  %v281 = vsel %vm273, %v264, %v280
  %v282 = vsel %vm272, %v279, %v281
  %v283 = vsel %vm271, %v261, %v264
  %v284 = vsel %vm274, %v270, 1326507024
  %v285 = vsel %vm273, %v267, %v284
  %v286 = vsel %vm272, %v283, %v285
  %v287 = vshll.u32 %v247, 8
  %v288 = vmul.u32.u64.compose %v287, %v286
  %v289 = vextract.low.u32 %v288
  %v290 = vextract.high.u32 %v288
  %v291 = vmul.u32.u64.compose %v287, %v282
  %v292 = vextract.low.u32 %v291
  %v293 = vextract.high.u32 %v291
  %v294 = vmul.u32 %v287, %v278
  %v295 = vadd.s32 %v290, %v292
  %vm296 = vc.u32 %v290, %v292
  %v297 = vadd.s32 %v293, 1
  %v298 = vsel %vm296, %v297, %v293
  %v299 = vadd.s32 %v294, %v298
  %v300 = vadd.s32 %v299, 536870912
  %v301 = vshrl.u32 %v300, 30
  %v302 = vshll.u32 %v301, 30
  %v303 = vsub.s32 %v299, %v302
  %vm304 = vcmp.lt.s32.totalorder %v303, 0
  %v305 = vsub.s32 0, %v303
  %v306 = vsel %vm304, %v305, %v303
  %v307 = vclz %v306
  %v308 = vsub.s32 %v307, 2
  %vm309 = vcmp.gt.s32.totalorder 0, %v308
  %v310 = vsel %vm309, 0, %v308
  %v311 = vsub.s32 32, %v310
  %v312 = vshll.u32 %v303, %v310
  %v313 = vshrl.u32 %v295, %v311
  %v314 = vor.u32 %v312, %v313
  %v315 = vsub.s32 4294967266, %v310
  %v316 = vadd.s32 %v315, 127
  %v317 = vshll.u32 %v316, 23
  %v318 = vor.u32 4788187, %v317
  %v319 = vand.u32 2147483647, %v318
  %v321 = vcvt.s32.f32 %v314
  %v322 = vmul.f32 %v321, %v319
  %v323 = vxor.u32 %v322, 2147483648
  %v324 = vsel %vm241, %v323, %v322
  %v325 = vsub.s32 4, %v301
  %v326 = vsel %vm241, %v325, %v301
  %v327 = vsel %vm240, %v161, %v324
  %v328 = vsel %vm240, 0, %v326
  %v329 = vcosq.f32.pop %v327
  %v330 = vsinq.f32.pop %v327
  %vm331 = vweird.f32 %v161
  %v332 = vand.u32 %v328, 3
  %vm333 = vcmp.lt.s32.totalorder %v332, 2
  %vm334 = vcmp.eq.s32.totalorder %v332, 0
  %v335 = vxor.u32 %v330, 2147483648
  %v336 = vsel %vm334, %v329, %v335
  %vm337 = vcmp.eq.s32.totalorder %v332, 2
  %v338 = vxor.u32 %v329, 2147483648
  %v339 = vsel %vm337, %v338, %v330
  %v340 = vsel %vm333, %v336, %v339
  %v341 = vsel %vm331, nan, %v340
  %v342 = vand.u32 2147483647, %v166
  %vm343 = vcmp.le.f32.partialorder %v342, 0.7853982
  %vm344 = vcmp.lt.s32.totalorder %v166, 0
  %v345 = vand.u32 %v166, 2139095040
  %v346 = vshrl.u32 %v345, 23
  %v347 = vsub.s32 %v346, 127
  %v348 = vand.u32 2147483647, %v166
  %v349 = vand.u32 %v348, 8388607
  %v350 = vor.u32 %v349, 8388608
  %v351 = vsub.s32 0, %v350
  %v352 = vadd.s32 %v347, 1
  %vm353 = vcmp.gt.s32.totalorder %v352, 0
  %v354 = vsel %vm353, %v352, 0
  %v355 = vshrl.u32 %v354, 5
  %v356 = vand.u32 %v354, 31
  %v357 = vsub.s32 32, %v356
  %v358 = vshrl.u32 683565275, %v357
  %v359 = vshll.u32 683565275, %v356
  %v360 = vshrl.u32 2475754826, %v357
  %v361 = vor.u32 %v359, %v360
  %v362 = vshll.u32 2475754826, %v356
  %v363 = vshrl.u32 2131351028, %v357
  %v364 = vor.u32 %v362, %v363
  %v365 = vshll.u32 2131351028, %v356
  %v366 = vshrl.u32 2102212464, %v357
  %v367 = vor.u32 %v365, %v366
  %v368 = vshll.u32 2102212464, %v356
  %v369 = vshrl.u32 920167782, %v357
  %v370 = vor.u32 %v368, %v369
  %v371 = vshll.u32 920167782, %v356
  %v372 = vshrl.u32 1326507024, %v357
  %v373 = vor.u32 %v371, %v372
  %vm374 = vcmp.lt.s32.totalorder %v355, 1
  %vm375 = vcmp.lt.s32.totalorder %v355, 2
  %vm376 = vcmp.lt.s32.totalorder %v355, 3
  %vm377 = vcmp.lt.s32.totalorder %v355, 4
  %v378 = vsel %vm374, %v358, %v361
  %v379 = vsel %vm377, %v367, 2102212464
  %v380 = vsel %vm376, %v364, %v379
  %v381 = vsel %vm375, %v378, %v380
  %v382 = vsel %vm374, %v361, %v364
  %v383 = vsel %vm377, %v370, 920167782
  %v384 = vsel %vm376, %v367, %v383
  %v385 = vsel %vm375, %v382, %v384
  %v386 = vsel %vm374, %v364, %v367
  %v387 = vsel %vm377, %v373, 1326507024
  %v388 = vsel %vm376, %v370, %v387
  %v389 = vsel %vm375, %v386, %v388
  %v390 = vshll.u32 %v350, 8
  %v391 = vmul.u32.u64.compose %v390, %v389
  %v392 = vextract.low.u32 %v391
  %v393 = vextract.high.u32 %v391
  %v394 = vmul.u32.u64.compose %v390, %v385
  %v395 = vextract.low.u32 %v394
  %v396 = vextract.high.u32 %v394
  %v397 = vmul.u32 %v390, %v381
  %v398 = vadd.s32 %v393, %v395
  %vm399 = vc.u32 %v393, %v395
  %v400 = vadd.s32 %v396, 1
  %v401 = vsel %vm399, %v400, %v396
  %v402 = vadd.s32 %v397, %v401
  %v403 = vadd.s32 %v402, 536870912
  %v404 = vshrl.u32 %v403, 30
  %v405 = vshll.u32 %v404, 30
  %v406 = vsub.s32 %v402, %v405
  %vm407 = vcmp.lt.s32.totalorder %v406, 0
  %v408 = vsub.s32 0, %v406
  %v409 = vsel %vm407, %v408, %v406
  %v410 = vclz %v409
  %v411 = vsub.s32 %v410, 2
  %vm412 = vcmp.gt.s32.totalorder 0, %v411
  %v413 = vsel %vm412, 0, %v411
  %v414 = vsub.s32 32, %v413
  %v415 = vshll.u32 %v406, %v413
  %v416 = vshrl.u32 %v398, %v414
  %v417 = vor.u32 %v415, %v416
  %v418 = vsub.s32 4294967266, %v413
  %v419 = vadd.s32 %v418, 127
  %v420 = vshll.u32 %v419, 23
  %v421 = vor.u32 4788187, %v420
  %v422 = vand.u32 2147483647, %v421
  %v424 = vcvt.s32.f32 %v417
  %v425 = vmul.f32 %v424, %v422
  %v426 = vxor.u32 %v425, 2147483648
  %v427 = vsel %vm344, %v426, %v425
  %v428 = vsub.s32 4, %v404
  %v429 = vsel %vm344, %v428, %v404
  %v430 = vsel %vm343, %v166, %v427
  %v431 = vsel %vm343, 0, %v429
  %v432 = vcosq.f32.pop %v430
  %v433 = vsinq.f32.pop %v430
  %vm434 = vweird.f32 %v166
  %v435 = vand.u32 %v431, 3
  %vm436 = vcmp.lt.s32.totalorder %v435, 2
  %vm437 = vcmp.eq.s32.totalorder %v435, 0
  %v438 = vxor.u32 %v433, 2147483648
  %v439 = vsel %vm437, %v432, %v438
  %vm440 = vcmp.eq.s32.totalorder %v435, 2
  %v441 = vxor.u32 %v432, 2147483648
  %v442 = vsel %vm440, %v441, %v433
  %v443 = vsel %vm436, %v439, %v442
  %v444 = vsel %vm434, nan, %v443
  %v445 = vand.u32 2147483647, %v171
  %vm446 = vcmp.le.f32.partialorder %v445, 0.7853982
  %vm447 = vcmp.lt.s32.totalorder %v171, 0
  %v448 = vand.u32 %v171, 2139095040
  %v449 = vshrl.u32 %v448, 23
  %v450 = vsub.s32 %v449, 127
  %v451 = vand.u32 2147483647, %v171
  %v452 = vand.u32 %v451, 8388607
  %v453 = vor.u32 %v452, 8388608
  %v454 = vsub.s32 0, %v453
  %v455 = vadd.s32 %v450, 1
  %vm456 = vcmp.gt.s32.totalorder %v455, 0
  %v457 = vsel %vm456, %v455, 0
  %v458 = vshrl.u32 %v457, 5
  %v459 = vand.u32 %v457, 31
  %v460 = vsub.s32 32, %v459
  %v461 = vshrl.u32 683565275, %v460
  %v462 = vshll.u32 683565275, %v459
  %v463 = vshrl.u32 2475754826, %v460
  %v464 = vor.u32 %v462, %v463
  %v465 = vshll.u32 2475754826, %v459
  %v466 = vshrl.u32 2131351028, %v460
  %v467 = vor.u32 %v465, %v466
  %v468 = vshll.u32 2131351028, %v459
  %v469 = vshrl.u32 2102212464, %v460
  %v470 = vor.u32 %v468, %v469
  %v471 = vshll.u32 2102212464, %v459
  %v472 = vshrl.u32 920167782, %v460
  %v473 = vor.u32 %v471, %v472
  %v474 = vshll.u32 920167782, %v459
  %v475 = vshrl.u32 1326507024, %v460
  %v476 = vor.u32 %v474, %v475
  %vm477 = vcmp.lt.s32.totalorder %v458, 1
  %vm478 = vcmp.lt.s32.totalorder %v458, 2
  %vm479 = vcmp.lt.s32.totalorder %v458, 3
  %vm480 = vcmp.lt.s32.totalorder %v458, 4
  %v481 = vsel %vm477, %v461, %v464
  %v482 = vsel %vm480, %v470, 2102212464
  %v483 = vsel %vm479, %v467, %v482
  %v484 = vsel %vm478, %v481, %v483
  %v485 = vsel %vm477, %v464, %v467
  %v486 = vsel %vm480, %v473, 920167782
  %v487 = vsel %vm479, %v470, %v486
  %v488 = vsel %vm478, %v485, %v487
  %v489 = vsel %vm477, %v467, %v470
  %v490 = vsel %vm480, %v476, 1326507024
  %v491 = vsel %vm479, %v473, %v490
  %v492 = vsel %vm478, %v489, %v491
  %v493 = vshll.u32 %v453, 8
  %v494 = vmul.u32.u64.compose %v493, %v492
  %v495 = vextract.low.u32 %v494
  %v496 = vextract.high.u32 %v494
  %v497 = vmul.u32.u64.compose %v493, %v488
  %v498 = vextract.low.u32 %v497
  %v499 = vextract.high.u32 %v497
  %v500 = vmul.u32 %v493, %v484
  %v501 = vadd.s32 %v496, %v498
  %vm502 = vc.u32 %v496, %v498
  %v503 = vadd.s32 %v499, 1
  %v504 = vsel %vm502, %v503, %v499
  %v505 = vadd.s32 %v500, %v504
  %v506 = vadd.s32 %v505, 536870912
  %v507 = vshrl.u32 %v506, 30
  %v508 = vshll.u32 %v507, 30
  %v509 = vsub.s32 %v505, %v508
  %vm510 = vcmp.lt.s32.totalorder %v509, 0
  %v511 = vsub.s32 0, %v509
  %v512 = vsel %vm510, %v511, %v509
  %v513 = vclz %v512
  %v514 = vsub.s32 %v513, 2
  %vm515 = vcmp.gt.s32.totalorder 0, %v514
  %v516 = vsel %vm515, 0, %v514
  %v517 = vsub.s32 32, %v516
  %v518 = vshll.u32 %v509, %v516
  %v519 = vshrl.u32 %v501, %v517
  %v520 = vor.u32 %v518, %v519
  %v521 = vsub.s32 4294967266, %v516
  %v522 = vadd.s32 %v521, 127
  %v523 = vshll.u32 %v522, 23
  %v524 = vor.u32 4788187, %v523
  %v525 = vand.u32 2147483647, %v524
  %v527 = vcvt.s32.f32 %v520
  %v528 = vmul.f32 %v527, %v525
  %v529 = vxor.u32 %v528, 2147483648
  %v530 = vsel %vm447, %v529, %v528
  %v531 = vsub.s32 4, %v507
  %v532 = vsel %vm447, %v531, %v507
  %v533 = vsel %vm446, %v171, %v530
  %v534 = vsel %vm446, 0, %v532
  %v535 = vcosq.f32.pop %v533
  %v536 = vsinq.f32.pop %v533
  %vm537 = vweird.f32 %v171
  %v538 = vand.u32 %v534, 3
  %vm539 = vcmp.lt.s32.totalorder %v538, 2
  %vm540 = vcmp.eq.s32.totalorder %v538, 0
  %v541 = vxor.u32 %v536, 2147483648
  %v542 = vsel %vm540, %v535, %v541
  %vm543 = vcmp.eq.s32.totalorder %v538, 2
  %v544 = vxor.u32 %v535, 2147483648
  %v545 = vsel %vm543, %v544, %v536
  %v546 = vsel %vm539, %v542, %v545
  %v547 = vsel %vm537, nan, %v546
  %v548 = vand.u32 2147483647, %v176
  %vm549 = vcmp.le.f32.partialorder %v548, 0.7853982
  %vm550 = vcmp.lt.s32.totalorder %v176, 0
  %v551 = vand.u32 %v176, 2139095040
  %v552 = vshrl.u32 %v551, 23
  %v553 = vsub.s32 %v552, 127
  %v554 = vand.u32 2147483647, %v176
  %v555 = vand.u32 %v554, 8388607
  %v556 = vor.u32 %v555, 8388608
  %v557 = vsub.s32 0, %v556
  %v558 = vadd.s32 %v553, 1
  %vm559 = vcmp.gt.s32.totalorder %v558, 0
  %v560 = vsel %vm559, %v558, 0
  %v561 = vshrl.u32 %v560, 5
  %v562 = vand.u32 %v560, 31
  %v563 = vsub.s32 32, %v562
  %v564 = vshrl.u32 683565275, %v563
  %v565 = vshll.u32 683565275, %v562
  %v566 = vshrl.u32 2475754826, %v563
  %v567 = vor.u32 %v565, %v566
  %v568 = vshll.u32 2475754826, %v562
  %v569 = vshrl.u32 2131351028, %v563
  %v570 = vor.u32 %v568, %v569
  %v571 = vshll.u32 2131351028, %v562
  %v572 = vshrl.u32 2102212464, %v563
  %v573 = vor.u32 %v571, %v572
  %v574 = vshll.u32 2102212464, %v562
  %v575 = vshrl.u32 920167782, %v563
  %v576 = vor.u32 %v574, %v575
  %v577 = vshll.u32 920167782, %v562
  %v578 = vshrl.u32 1326507024, %v563
  %v579 = vor.u32 %v577, %v578
  %vm580 = vcmp.lt.s32.totalorder %v561, 1
  %vm581 = vcmp.lt.s32.totalorder %v561, 2
  %vm582 = vcmp.lt.s32.totalorder %v561, 3
  %vm583 = vcmp.lt.s32.totalorder %v561, 4
  %v584 = vsel %vm580, %v564, %v567
  %v585 = vsel %vm583, %v573, 2102212464
  %v586 = vsel %vm582, %v570, %v585
  %v587 = vsel %vm581, %v584, %v586
  %v588 = vsel %vm580, %v567, %v570
  %v589 = vsel %vm583, %v576, 920167782
  %v590 = vsel %vm582, %v573, %v589
  %v591 = vsel %vm581, %v588, %v590
  %v592 = vsel %vm580, %v570, %v573
  %v593 = vsel %vm583, %v579, 1326507024
  %v594 = vsel %vm582, %v576, %v593
  %v595 = vsel %vm581, %v592, %v594
  %v596 = vshll.u32 %v556, 8
  %v597 = vmul.u32.u64.compose %v596, %v595
  %v598 = vextract.low.u32 %v597
  %v599 = vextract.high.u32 %v597
  %v600 = vmul.u32.u64.compose %v596, %v591
  %v601 = vextract.low.u32 %v600
  %v602 = vextract.high.u32 %v600
  %v603 = vmul.u32 %v596, %v587
  %v604 = vadd.s32 %v599, %v601
  %vm605 = vc.u32 %v599, %v601
  %v606 = vadd.s32 %v602, 1
  %v607 = vsel %vm605, %v606, %v602
  %v608 = vadd.s32 %v603, %v607
  %v609 = vadd.s32 %v608, 536870912
  %v610 = vshrl.u32 %v609, 30
  %v611 = vshll.u32 %v610, 30
  %v612 = vsub.s32 %v608, %v611
  %vm613 = vcmp.lt.s32.totalorder %v612, 0
  %v614 = vsub.s32 0, %v612
  %v615 = vsel %vm613, %v614, %v612
  %v616 = vclz %v615
  %v617 = vsub.s32 %v616, 2
  %vm618 = vcmp.gt.s32.totalorder 0, %v617
  %v619 = vsel %vm618, 0, %v617
  %v620 = vsub.s32 32, %v619
  %v621 = vshll.u32 %v612, %v619
  %v622 = vshrl.u32 %v604, %v620
  %v623 = vor.u32 %v621, %v622
  %v624 = vsub.s32 4294967266, %v619
  %v625 = vadd.s32 %v624, 127
  %v626 = vshll.u32 %v625, 23
  %v627 = vor.u32 4788187, %v626
  %v628 = vand.u32 2147483647, %v627
  %v630 = vcvt.s32.f32 %v623
  %v631 = vmul.f32 %v630, %v628
  %v632 = vxor.u32 %v631, 2147483648
  %v633 = vsel %vm550, %v632, %v631
  %v634 = vsub.s32 4, %v610
  %v635 = vsel %vm550, %v634, %v610
  %v636 = vsel %vm549, %v176, %v633
  %v637 = vsel %vm549, 0, %v635
  %v638 = vcosq.f32.pop %v636
  %v639 = vsinq.f32.pop %v636
  %vm640 = vweird.f32 %v176
  %v641 = vand.u32 %v637, 3
  %vm642 = vcmp.lt.s32.totalorder %v641, 2
  %vm643 = vcmp.eq.s32.totalorder %v641, 0
  %v644 = vxor.u32 %v639, 2147483648
  %v645 = vsel %vm643, %v638, %v644
  %vm646 = vcmp.eq.s32.totalorder %v641, 2
  %v647 = vxor.u32 %v638, 2147483648
  %v648 = vsel %vm646, %v647, %v639
  %v649 = vsel %vm642, %v645, %v648
  %v650 = vsel %vm640, nan, %v649
  %v651 = vand.u32 2147483647, %v181
  %vm652 = vcmp.le.f32.partialorder %v651, 0.7853982
  %vm653 = vcmp.lt.s32.totalorder %v181, 0
  %v654 = vand.u32 %v181, 2139095040
  %v655 = vshrl.u32 %v654, 23
  %v656 = vsub.s32 %v655, 127
  %v657 = vand.u32 2147483647, %v181
  %v658 = vand.u32 %v657, 8388607
  %v659 = vor.u32 %v658, 8388608
  %v660 = vsub.s32 0, %v659
  %v661 = vadd.s32 %v656, 1
  %vm662 = vcmp.gt.s32.totalorder %v661, 0
  %v663 = vsel %vm662, %v661, 0
  %v664 = vshrl.u32 %v663, 5
  %v665 = vand.u32 %v663, 31
  %v666 = vsub.s32 32, %v665
  %v667 = vshrl.u32 683565275, %v666
  %v668 = vshll.u32 683565275, %v665
  %v669 = vshrl.u32 2475754826, %v666
  %v670 = vor.u32 %v668, %v669
  %v671 = vshll.u32 2475754826, %v665
  %v672 = vshrl.u32 2131351028, %v666
  %v673 = vor.u32 %v671, %v672
  %v674 = vshll.u32 2131351028, %v665
  %v675 = vshrl.u32 2102212464, %v666
  %v676 = vor.u32 %v674, %v675
  %v677 = vshll.u32 2102212464, %v665
  %v678 = vshrl.u32 920167782, %v666
  %v679 = vor.u32 %v677, %v678
  %v680 = vshll.u32 920167782, %v665
  %v681 = vshrl.u32 1326507024, %v666
  %v682 = vor.u32 %v680, %v681
  %vm683 = vcmp.lt.s32.totalorder %v664, 1
  %vm684 = vcmp.lt.s32.totalorder %v664, 2
  %vm685 = vcmp.lt.s32.totalorder %v664, 3
  %vm686 = vcmp.lt.s32.totalorder %v664, 4
  %v687 = vsel %vm683, %v667, %v670
  %v688 = vsel %vm686, %v676, 2102212464
  %v689 = vsel %vm685, %v673, %v688
  %v690 = vsel %vm684, %v687, %v689
  %v691 = vsel %vm683, %v670, %v673
  %v692 = vsel %vm686, %v679, 920167782
  %v693 = vsel %vm685, %v676, %v692
  %v694 = vsel %vm684, %v691, %v693
  %v695 = vsel %vm683, %v673, %v676
  %v696 = vsel %vm686, %v682, 1326507024
  %v697 = vsel %vm685, %v679, %v696
  %v698 = vsel %vm684, %v695, %v697
  %v699 = vshll.u32 %v659, 8
  %v700 = vmul.u32.u64.compose %v699, %v698
  %v701 = vextract.low.u32 %v700
  %v702 = vextract.high.u32 %v700
  %v703 = vmul.u32.u64.compose %v699, %v694
  %v704 = vextract.low.u32 %v703
  %v705 = vextract.high.u32 %v703
  %v706 = vmul.u32 %v699, %v690
  %v707 = vadd.s32 %v702, %v704
  %vm708 = vc.u32 %v702, %v704
  %v709 = vadd.s32 %v705, 1
  %v710 = vsel %vm708, %v709, %v705
  %v711 = vadd.s32 %v706, %v710
  %v712 = vadd.s32 %v711, 536870912
  %v713 = vshrl.u32 %v712, 30
  %v714 = vshll.u32 %v713, 30
  %v715 = vsub.s32 %v711, %v714
  %vm716 = vcmp.lt.s32.totalorder %v715, 0
  %v717 = vsub.s32 0, %v715
  %v718 = vsel %vm716, %v717, %v715
  %v719 = vclz %v718
  %v720 = vsub.s32 %v719, 2
  %vm721 = vcmp.gt.s32.totalorder 0, %v720
  %v722 = vsel %vm721, 0, %v720
  %v723 = vsub.s32 32, %v722
  %v724 = vshll.u32 %v715, %v722
  %v725 = vshrl.u32 %v707, %v723
  %v726 = vor.u32 %v724, %v725
  %v727 = vsub.s32 4294967266, %v722
  %v728 = vadd.s32 %v727, 127
  %v729 = vshll.u32 %v728, 23
  %v730 = vor.u32 4788187, %v729
  %v731 = vand.u32 2147483647, %v730
  %v733 = vcvt.s32.f32 %v726
  %v734 = vmul.f32 %v733, %v731
  %v735 = vxor.u32 %v734, 2147483648
  %v736 = vsel %vm653, %v735, %v734
  %v737 = vsub.s32 4, %v713
  %v738 = vsel %vm653, %v737, %v713
  %v739 = vsel %vm652, %v181, %v736
  %v740 = vsel %vm652, 0, %v738
  %v741 = vcosq.f32.pop %v739
  %v742 = vsinq.f32.pop %v739
  %vm743 = vweird.f32 %v181
  %v744 = vand.u32 %v740, 3
  %vm745 = vcmp.lt.s32.totalorder %v744, 2
  %vm746 = vcmp.eq.s32.totalorder %v744, 0
  %v747 = vxor.u32 %v742, 2147483648
  %v748 = vsel %vm746, %v741, %v747
  %vm749 = vcmp.eq.s32.totalorder %v744, 2
  %v750 = vxor.u32 %v741, 2147483648
  %v751 = vsel %vm749, %v750, %v742
  %v752 = vsel %vm745, %v748, %v751
  %v753 = vsel %vm743, nan, %v752
  %v754 = vand.u32 2147483647, %v186
  %vm755 = vcmp.le.f32.partialorder %v754, 0.7853982
  %vm756 = vcmp.lt.s32.totalorder %v186, 0
  %v757 = vand.u32 %v186, 2139095040
  %v758 = vshrl.u32 %v757, 23
  %v759 = vsub.s32 %v758, 127
  %v760 = vand.u32 2147483647, %v186
  %v761 = vand.u32 %v760, 8388607
  %v762 = vor.u32 %v761, 8388608
  %v763 = vsub.s32 0, %v762
  %v764 = vadd.s32 %v759, 1
  %vm765 = vcmp.gt.s32.totalorder %v764, 0
  %v766 = vsel %vm765, %v764, 0
  %v767 = vshrl.u32 %v766, 5
  %v768 = vand.u32 %v766, 31
  %v769 = vsub.s32 32, %v768
  %v770 = vshrl.u32 683565275, %v769
  %v771 = vshll.u32 683565275, %v768
  %v772 = vshrl.u32 2475754826, %v769
  %v773 = vor.u32 %v771, %v772
  %v774 = vshll.u32 2475754826, %v768
  %v775 = vshrl.u32 2131351028, %v769
  %v776 = vor.u32 %v774, %v775
  %v777 = vshll.u32 2131351028, %v768
  %v778 = vshrl.u32 2102212464, %v769
  %v779 = vor.u32 %v777, %v778
  %v780 = vshll.u32 2102212464, %v768
  %v781 = vshrl.u32 920167782, %v769
  %v782 = vor.u32 %v780, %v781
  %v783 = vshll.u32 920167782, %v768
  %v784 = vshrl.u32 1326507024, %v769
  %v785 = vor.u32 %v783, %v784
  %vm786 = vcmp.lt.s32.totalorder %v767, 1
  %vm787 = vcmp.lt.s32.totalorder %v767, 2
  %vm788 = vcmp.lt.s32.totalorder %v767, 3
  %vm789 = vcmp.lt.s32.totalorder %v767, 4
  %v790 = vsel %vm786, %v770, %v773
  %v791 = vsel %vm789, %v779, 2102212464
  %v792 = vsel %vm788, %v776, %v791
  %v793 = vsel %vm787, %v790, %v792
  %v794 = vsel %vm786, %v773, %v776
  %v795 = vsel %vm789, %v782, 920167782
  %v796 = vsel %vm788, %v779, %v795
  %v797 = vsel %vm787, %v794, %v796
  %v798 = vsel %vm786, %v776, %v779
  %v799 = vsel %vm789, %v785, 1326507024
  %v800 = vsel %vm788, %v782, %v799
  %v801 = vsel %vm787, %v798, %v800
  %v802 = vshll.u32 %v762, 8
  %v803 = vmul.u32.u64.compose %v802, %v801
  %v804 = vextract.low.u32 %v803
  %v805 = vextract.high.u32 %v803
  %v806 = vmul.u32.u64.compose %v802, %v797
  %v807 = vextract.low.u32 %v806
  %v808 = vextract.high.u32 %v806
  %v809 = vmul.u32 %v802, %v793
  %v810 = vadd.s32 %v805, %v807
  %vm811 = vc.u32 %v805, %v807
  %v812 = vadd.s32 %v808, 1
  %v813 = vsel %vm811, %v812, %v808
  %v814 = vadd.s32 %v809, %v813
  %v815 = vadd.s32 %v814, 536870912
  %v816 = vshrl.u32 %v815, 30
  %v817 = vshll.u32 %v816, 30
  %v818 = vsub.s32 %v814, %v817
  %vm819 = vcmp.lt.s32.totalorder %v818, 0
  %v820 = vsub.s32 0, %v818
  %v821 = vsel %vm819, %v820, %v818
  %v822 = vclz %v821
  %v823 = vsub.s32 %v822, 2
  %vm824 = vcmp.gt.s32.totalorder 0, %v823
  %v825 = vsel %vm824, 0, %v823
  %v826 = vsub.s32 32, %v825
  %v827 = vshll.u32 %v818, %v825
  %v828 = vshrl.u32 %v810, %v826
  %v829 = vor.u32 %v827, %v828
  %v830 = vsub.s32 4294967266, %v825
  %v831 = vadd.s32 %v830, 127
  %v832 = vshll.u32 %v831, 23
  %v833 = vor.u32 4788187, %v832
  %v834 = vand.u32 2147483647, %v833
  %v836 = vcvt.s32.f32 %v829
  %v837 = vmul.f32 %v836, %v834
  %v838 = vxor.u32 %v837, 2147483648
  %v839 = vsel %vm756, %v838, %v837
  %v840 = vsub.s32 4, %v816
  %v841 = vsel %vm756, %v840, %v816
  %v842 = vsel %vm755, %v186, %v839
  %v843 = vsel %vm755, 0, %v841
  %v844 = vcosq.f32.pop %v842
  %v845 = vsinq.f32.pop %v842
  %vm846 = vweird.f32 %v186
  %v847 = vand.u32 %v843, 3
  %vm848 = vcmp.lt.s32.totalorder %v847, 2
  %vm849 = vcmp.eq.s32.totalorder %v847, 0
  %v850 = vxor.u32 %v845, 2147483648
  %v851 = vsel %vm849, %v844, %v850
  %vm852 = vcmp.eq.s32.totalorder %v847, 2
  %v853 = vxor.u32 %v844, 2147483648
  %v854 = vsel %vm852, %v853, %v845
  %v855 = vsel %vm848, %v851, %v854
  %v856 = vsel %vm846, nan, %v855
  %v857 = vand.u32 2147483647, %v191
  %vm858 = vcmp.le.f32.partialorder %v857, 0.7853982
  %vm859 = vcmp.lt.s32.totalorder %v191, 0
  %v860 = vand.u32 %v191, 2139095040
  %v861 = vshrl.u32 %v860, 23
  %v862 = vsub.s32 %v861, 127
  %v863 = vand.u32 2147483647, %v191
  %v864 = vand.u32 %v863, 8388607
  %v865 = vor.u32 %v864, 8388608
  %v866 = vsub.s32 0, %v865
  %v867 = vadd.s32 %v862, 1
  %vm868 = vcmp.gt.s32.totalorder %v867, 0
  %v869 = vsel %vm868, %v867, 0
  %v870 = vshrl.u32 %v869, 5
  %v871 = vand.u32 %v869, 31
  %v872 = vsub.s32 32, %v871
  %v873 = vshrl.u32 683565275, %v872
  %v874 = vshll.u32 683565275, %v871
  %v875 = vshrl.u32 2475754826, %v872
  %v876 = vor.u32 %v874, %v875
  %v877 = vshll.u32 2475754826, %v871
  %v878 = vshrl.u32 2131351028, %v872
  %v879 = vor.u32 %v877, %v878
  %v880 = vshll.u32 2131351028, %v871
  %v881 = vshrl.u32 2102212464, %v872
  %v882 = vor.u32 %v880, %v881
  %v883 = vshll.u32 2102212464, %v871
  %v884 = vshrl.u32 920167782, %v872
  %v885 = vor.u32 %v883, %v884
  %v886 = vshll.u32 920167782, %v871
  %v887 = vshrl.u32 1326507024, %v872
  %v888 = vor.u32 %v886, %v887
  %vm889 = vcmp.lt.s32.totalorder %v870, 1
  %vm890 = vcmp.lt.s32.totalorder %v870, 2
  %vm891 = vcmp.lt.s32.totalorder %v870, 3
  %vm892 = vcmp.lt.s32.totalorder %v870, 4
  %v893 = vsel %vm889, %v873, %v876
  %v894 = vsel %vm892, %v882, 2102212464
  %v895 = vsel %vm891, %v879, %v894
  %v896 = vsel %vm890, %v893, %v895
  %v897 = vsel %vm889, %v876, %v879
  %v898 = vsel %vm892, %v885, 920167782
  %v899 = vsel %vm891, %v882, %v898
  %v900 = vsel %vm890, %v897, %v899
  %v901 = vsel %vm889, %v879, %v882
  %v902 = vsel %vm892, %v888, 1326507024
  %v903 = vsel %vm891, %v885, %v902
  %v904 = vsel %vm890, %v901, %v903
  %v905 = vshll.u32 %v865, 8
  %v906 = vmul.u32.u64.compose %v905, %v904
  %v907 = vextract.low.u32 %v906
  %v908 = vextract.high.u32 %v906
  %v909 = vmul.u32.u64.compose %v905, %v900
  %v910 = vextract.low.u32 %v909
  %v911 = vextract.high.u32 %v909
  %v912 = vmul.u32 %v905, %v896
  %v913 = vadd.s32 %v908, %v910
  %vm914 = vc.u32 %v908, %v910
  %v915 = vadd.s32 %v911, 1
  %v916 = vsel %vm914, %v915, %v911
  %v917 = vadd.s32 %v912, %v916
  %v918 = vadd.s32 %v917, 536870912
  %v919 = vshrl.u32 %v918, 30
  %v920 = vshll.u32 %v919, 30
  %v921 = vsub.s32 %v917, %v920
  %vm922 = vcmp.lt.s32.totalorder %v921, 0
  %v923 = vsub.s32 0, %v921
  %v924 = vsel %vm922, %v923, %v921
  %v925 = vclz %v924
  %v926 = vsub.s32 %v925, 2
  %vm927 = vcmp.gt.s32.totalorder 0, %v926
  %v928 = vsel %vm927, 0, %v926
  %v929 = vsub.s32 32, %v928
  %v930 = vshll.u32 %v921, %v928
  %v931 = vshrl.u32 %v913, %v929
  %v932 = vor.u32 %v930, %v931
  %v933 = vsub.s32 4294967266, %v928
  %v934 = vadd.s32 %v933, 127
  %v935 = vshll.u32 %v934, 23
  %v936 = vor.u32 4788187, %v935
  %v937 = vand.u32 2147483647, %v936
  %v939 = vcvt.s32.f32 %v932
  %v940 = vmul.f32 %v939, %v937
  %v941 = vxor.u32 %v940, 2147483648
  %v942 = vsel %vm859, %v941, %v940
  %v943 = vsub.s32 4, %v919
  %v944 = vsel %vm859, %v943, %v919
  %v945 = vsel %vm858, %v191, %v942
  %v946 = vsel %vm858, 0, %v944
  %v947 = vcosq.f32.pop %v945
  %v948 = vsinq.f32.pop %v945
  %vm949 = vweird.f32 %v191
  %v950 = vand.u32 %v946, 3
  %vm951 = vcmp.lt.s32.totalorder %v950, 2
  %vm952 = vcmp.eq.s32.totalorder %v950, 0
  %v953 = vxor.u32 %v948, 2147483648
  %v954 = vsel %vm952, %v947, %v953
  %vm955 = vcmp.eq.s32.totalorder %v950, 2
  %v956 = vxor.u32 %v947, 2147483648
  %v957 = vsel %vm955, %v956, %v948
  %v958 = vsel %vm951, %v954, %v957
  %v959 = vsel %vm949, nan, %v958
  %v960 = vand.u32 2147483647, %v196
  %vm961 = vcmp.le.f32.partialorder %v960, 0.7853982
  %vm962 = vcmp.lt.s32.totalorder %v196, 0
  %v963 = vand.u32 %v196, 2139095040
  %v964 = vshrl.u32 %v963, 23
  %v965 = vsub.s32 %v964, 127
  %v966 = vand.u32 2147483647, %v196
  %v967 = vand.u32 %v966, 8388607
  %v968 = vor.u32 %v967, 8388608
  %v969 = vsub.s32 0, %v968
  %v970 = vadd.s32 %v965, 1
  %vm971 = vcmp.gt.s32.totalorder %v970, 0
  %v972 = vsel %vm971, %v970, 0
  %v973 = vshrl.u32 %v972, 5
  %v974 = vand.u32 %v972, 31
  %v975 = vsub.s32 32, %v974
  %v976 = vshrl.u32 683565275, %v975
  %v977 = vshll.u32 683565275, %v974
  %v978 = vshrl.u32 2475754826, %v975
  %v979 = vor.u32 %v977, %v978
  %v980 = vshll.u32 2475754826, %v974
  %v981 = vshrl.u32 2131351028, %v975
  %v982 = vor.u32 %v980, %v981
  %v983 = vshll.u32 2131351028, %v974
  %v984 = vshrl.u32 2102212464, %v975
  %v985 = vor.u32 %v983, %v984
  %v986 = vshll.u32 2102212464, %v974
  %v987 = vshrl.u32 920167782, %v975
  %v988 = vor.u32 %v986, %v987
  %v989 = vshll.u32 920167782, %v974
  %v990 = vshrl.u32 1326507024, %v975
  %v991 = vor.u32 %v989, %v990
  %vm992 = vcmp.lt.s32.totalorder %v973, 1
  %vm993 = vcmp.lt.s32.totalorder %v973, 2
  %vm994 = vcmp.lt.s32.totalorder %v973, 3
  %vm995 = vcmp.lt.s32.totalorder %v973, 4
  %v996 = vsel %vm992, %v976, %v979
  %v997 = vsel %vm995, %v985, 2102212464
  %v998 = vsel %vm994, %v982, %v997
  %v999 = vsel %vm993, %v996, %v998
  %v1000 = vsel %vm992, %v979, %v982
  %v1001 = vsel %vm995, %v988, 920167782
  %v1002 = vsel %vm994, %v985, %v1001
  %v1003 = vsel %vm993, %v1000, %v1002
  %v1004 = vsel %vm992, %v982, %v985
  %v1005 = vsel %vm995, %v991, 1326507024
  %v1006 = vsel %vm994, %v988, %v1005
  %v1007 = vsel %vm993, %v1004, %v1006
  %v1008 = vshll.u32 %v968, 8
  %v1009 = vmul.u32.u64.compose %v1008, %v1007
  %v1010 = vextract.low.u32 %v1009
  %v1011 = vextract.high.u32 %v1009
  %v1012 = vmul.u32.u64.compose %v1008, %v1003
  %v1013 = vextract.low.u32 %v1012
  %v1014 = vextract.high.u32 %v1012
  %v1015 = vmul.u32 %v1008, %v999
  %v1016 = vadd.s32 %v1011, %v1013
  %vm1017 = vc.u32 %v1011, %v1013
  %v1018 = vadd.s32 %v1014, 1
  %v1019 = vsel %vm1017, %v1018, %v1014
  %v1020 = vadd.s32 %v1015, %v1019
  %v1021 = vadd.s32 %v1020, 536870912
  %v1022 = vshrl.u32 %v1021, 30
  %v1023 = vshll.u32 %v1022, 30
  %v1024 = vsub.s32 %v1020, %v1023
  %vm1025 = vcmp.lt.s32.totalorder %v1024, 0
  %v1026 = vsub.s32 0, %v1024
  %v1027 = vsel %vm1025, %v1026, %v1024
  %v1028 = vclz %v1027
  %v1029 = vsub.s32 %v1028, 2
  %vm1030 = vcmp.gt.s32.totalorder 0, %v1029
  %v1031 = vsel %vm1030, 0, %v1029
  %v1032 = vsub.s32 32, %v1031
  %v1033 = vshll.u32 %v1024, %v1031
  %v1034 = vshrl.u32 %v1016, %v1032
  %v1035 = vor.u32 %v1033, %v1034
  %v1036 = vsub.s32 4294967266, %v1031
  %v1037 = vadd.s32 %v1036, 127
  %v1038 = vshll.u32 %v1037, 23
  %v1039 = vor.u32 4788187, %v1038
  %v1040 = vand.u32 2147483647, %v1039
  %v1042 = vcvt.s32.f32 %v1035
  %v1043 = vmul.f32 %v1042, %v1040
  %v1044 = vxor.u32 %v1043, 2147483648
  %v1045 = vsel %vm962, %v1044, %v1043
  %v1046 = vsub.s32 4, %v1022
  %v1047 = vsel %vm962, %v1046, %v1022
  %v1048 = vsel %vm961, %v196, %v1045
  %v1049 = vsel %vm961, 0, %v1047
  %v1050 = vcosq.f32.pop %v1048
  %v1051 = vsinq.f32.pop %v1048
  %vm1052 = vweird.f32 %v196
  %v1053 = vand.u32 %v1049, 3
  %vm1054 = vcmp.lt.s32.totalorder %v1053, 2
  %vm1055 = vcmp.eq.s32.totalorder %v1053, 0
  %v1056 = vxor.u32 %v1051, 2147483648
  %v1057 = vsel %vm1055, %v1050, %v1056
  %vm1058 = vcmp.eq.s32.totalorder %v1053, 2
  %v1059 = vxor.u32 %v1050, 2147483648
  %v1060 = vsel %vm1058, %v1059, %v1051
  %v1061 = vsel %vm1054, %v1057, %v1060
  %v1062 = vsel %vm1052, nan, %v1061
  %v1063 = vand.u32 2147483647, %v201
  %vm1064 = vcmp.le.f32.partialorder %v1063, 0.7853982
  %vm1065 = vcmp.lt.s32.totalorder %v201, 0
  %v1066 = vand.u32 %v201, 2139095040
  %v1067 = vshrl.u32 %v1066, 23
  %v1068 = vsub.s32 %v1067, 127
  %v1069 = vand.u32 2147483647, %v201
  %v1070 = vand.u32 %v1069, 8388607
  %v1071 = vor.u32 %v1070, 8388608
  %v1072 = vsub.s32 0, %v1071
  %v1073 = vadd.s32 %v1068, 1
  %vm1074 = vcmp.gt.s32.totalorder %v1073, 0
  %v1075 = vsel %vm1074, %v1073, 0
  %v1076 = vshrl.u32 %v1075, 5
  %v1077 = vand.u32 %v1075, 31
  %v1078 = vsub.s32 32, %v1077
  %v1079 = vshrl.u32 683565275, %v1078
  %v1080 = vshll.u32 683565275, %v1077
  %v1081 = vshrl.u32 2475754826, %v1078
  %v1082 = vor.u32 %v1080, %v1081
  %v1083 = vshll.u32 2475754826, %v1077
  %v1084 = vshrl.u32 2131351028, %v1078
  %v1085 = vor.u32 %v1083, %v1084
  %v1086 = vshll.u32 2131351028, %v1077
  %v1087 = vshrl.u32 2102212464, %v1078
  %v1088 = vor.u32 %v1086, %v1087
  %v1089 = vshll.u32 2102212464, %v1077
  %v1090 = vshrl.u32 920167782, %v1078
  %v1091 = vor.u32 %v1089, %v1090
  %v1092 = vshll.u32 920167782, %v1077
  %v1093 = vshrl.u32 1326507024, %v1078
  %v1094 = vor.u32 %v1092, %v1093
  %vm1095 = vcmp.lt.s32.totalorder %v1076, 1
  %vm1096 = vcmp.lt.s32.totalorder %v1076, 2
  %vm1097 = vcmp.lt.s32.totalorder %v1076, 3
  %vm1098 = vcmp.lt.s32.totalorder %v1076, 4
  %v1099 = vsel %vm1095, %v1079, %v1082
  %v1100 = vsel %vm1098, %v1088, 2102212464
  %v1101 = vsel %vm1097, %v1085, %v1100
  %v1102 = vsel %vm1096, %v1099, %v1101
  %v1103 = vsel %vm1095, %v1082, %v1085
  %v1104 = vsel %vm1098, %v1091, 920167782
  %v1105 = vsel %vm1097, %v1088, %v1104
  %v1106 = vsel %vm1096, %v1103, %v1105
  %v1107 = vsel %vm1095, %v1085, %v1088
  %v1108 = vsel %vm1098, %v1094, 1326507024
  %v1109 = vsel %vm1097, %v1091, %v1108
  %v1110 = vsel %vm1096, %v1107, %v1109
  %v1111 = vshll.u32 %v1071, 8
  %v1112 = vmul.u32.u64.compose %v1111, %v1110
  %v1113 = vextract.low.u32 %v1112
  %v1114 = vextract.high.u32 %v1112
  %v1115 = vmul.u32.u64.compose %v1111, %v1106
  %v1116 = vextract.low.u32 %v1115
  %v1117 = vextract.high.u32 %v1115
  %v1118 = vmul.u32 %v1111, %v1102
  %v1119 = vadd.s32 %v1114, %v1116
  %vm1120 = vc.u32 %v1114, %v1116
  %v1121 = vadd.s32 %v1117, 1
  %v1122 = vsel %vm1120, %v1121, %v1117
  %v1123 = vadd.s32 %v1118, %v1122
  %v1124 = vadd.s32 %v1123, 536870912
  %v1125 = vshrl.u32 %v1124, 30
  %v1126 = vshll.u32 %v1125, 30
  %v1127 = vsub.s32 %v1123, %v1126
  %vm1128 = vcmp.lt.s32.totalorder %v1127, 0
  %v1129 = vsub.s32 0, %v1127
  %v1130 = vsel %vm1128, %v1129, %v1127
  %v1131 = vclz %v1130
  %v1132 = vsub.s32 %v1131, 2
  %vm1133 = vcmp.gt.s32.totalorder 0, %v1132
  %v1134 = vsel %vm1133, 0, %v1132
  %v1135 = vsub.s32 32, %v1134
  %v1136 = vshll.u32 %v1127, %v1134
  %v1137 = vshrl.u32 %v1119, %v1135
  %v1138 = vor.u32 %v1136, %v1137
  %v1139 = vsub.s32 4294967266, %v1134
  %v1140 = vadd.s32 %v1139, 127
  %v1141 = vshll.u32 %v1140, 23
  %v1142 = vor.u32 4788187, %v1141
  %v1143 = vand.u32 2147483647, %v1142
  %v1145 = vcvt.s32.f32 %v1138
  %v1146 = vmul.f32 %v1145, %v1143
  %v1147 = vxor.u32 %v1146, 2147483648
  %v1148 = vsel %vm1065, %v1147, %v1146
  %v1149 = vsub.s32 4, %v1125
  %v1150 = vsel %vm1065, %v1149, %v1125
  %v1151 = vsel %vm1064, %v201, %v1148
  %v1152 = vsel %vm1064, 0, %v1150
  %v1153 = vcosq.f32.pop %v1151
  %v1154 = vsinq.f32.pop %v1151
  %vm1155 = vweird.f32 %v201
  %v1156 = vand.u32 %v1152, 3
  %vm1157 = vcmp.lt.s32.totalorder %v1156, 2
  %vm1158 = vcmp.eq.s32.totalorder %v1156, 0
  %v1159 = vxor.u32 %v1154, 2147483648
  %v1160 = vsel %vm1158, %v1153, %v1159
  %vm1161 = vcmp.eq.s32.totalorder %v1156, 2
  %v1162 = vxor.u32 %v1153, 2147483648
  %v1163 = vsel %vm1161, %v1162, %v1154
  %v1164 = vsel %vm1157, %v1160, %v1163
  %v1165 = vsel %vm1155, nan, %v1164
  %v1166 = vand.u32 2147483647, %v206
  %vm1167 = vcmp.le.f32.partialorder %v1166, 0.7853982
  %vm1168 = vcmp.lt.s32.totalorder %v206, 0
  %v1169 = vand.u32 %v206, 2139095040
  %v1170 = vshrl.u32 %v1169, 23
  %v1171 = vsub.s32 %v1170, 127
  %v1172 = vand.u32 2147483647, %v206
  %v1173 = vand.u32 %v1172, 8388607
  %v1174 = vor.u32 %v1173, 8388608
  %v1175 = vsub.s32 0, %v1174
  %v1176 = vadd.s32 %v1171, 1
  %vm1177 = vcmp.gt.s32.totalorder %v1176, 0
  %v1178 = vsel %vm1177, %v1176, 0
  %v1179 = vshrl.u32 %v1178, 5
  %v1180 = vand.u32 %v1178, 31
  %v1181 = vsub.s32 32, %v1180
  %v1182 = vshrl.u32 683565275, %v1181
  %v1183 = vshll.u32 683565275, %v1180
  %v1184 = vshrl.u32 2475754826, %v1181
  %v1185 = vor.u32 %v1183, %v1184
  %v1186 = vshll.u32 2475754826, %v1180
  %v1187 = vshrl.u32 2131351028, %v1181
  %v1188 = vor.u32 %v1186, %v1187
  %v1189 = vshll.u32 2131351028, %v1180
  %v1190 = vshrl.u32 2102212464, %v1181
  %v1191 = vor.u32 %v1189, %v1190
  %v1192 = vshll.u32 2102212464, %v1180
  %v1193 = vshrl.u32 920167782, %v1181
  %v1194 = vor.u32 %v1192, %v1193
  %v1195 = vshll.u32 920167782, %v1180
  %v1196 = vshrl.u32 1326507024, %v1181
  %v1197 = vor.u32 %v1195, %v1196
  %vm1198 = vcmp.lt.s32.totalorder %v1179, 1
  %vm1199 = vcmp.lt.s32.totalorder %v1179, 2
  %vm1200 = vcmp.lt.s32.totalorder %v1179, 3
  %vm1201 = vcmp.lt.s32.totalorder %v1179, 4
  %v1202 = vsel %vm1198, %v1182, %v1185
  %v1203 = vsel %vm1201, %v1191, 2102212464
  %v1204 = vsel %vm1200, %v1188, %v1203
  %v1205 = vsel %vm1199, %v1202, %v1204
  %v1206 = vsel %vm1198, %v1185, %v1188
  %v1207 = vsel %vm1201, %v1194, 920167782
  %v1208 = vsel %vm1200, %v1191, %v1207
  %v1209 = vsel %vm1199, %v1206, %v1208
  %v1210 = vsel %vm1198, %v1188, %v1191
  %v1211 = vsel %vm1201, %v1197, 1326507024
  %v1212 = vsel %vm1200, %v1194, %v1211
  %v1213 = vsel %vm1199, %v1210, %v1212
  %v1214 = vshll.u32 %v1174, 8
  %v1215 = vmul.u32.u64.compose %v1214, %v1213
  %v1216 = vextract.low.u32 %v1215
  %v1217 = vextract.high.u32 %v1215
  %v1218 = vmul.u32.u64.compose %v1214, %v1209
  %v1219 = vextract.low.u32 %v1218
  %v1220 = vextract.high.u32 %v1218
  %v1221 = vmul.u32 %v1214, %v1205
  %v1222 = vadd.s32 %v1217, %v1219
  %vm1223 = vc.u32 %v1217, %v1219
  %v1224 = vadd.s32 %v1220, 1
  %v1225 = vsel %vm1223, %v1224, %v1220
  %v1226 = vadd.s32 %v1221, %v1225
  %v1227 = vadd.s32 %v1226, 536870912
  %v1228 = vshrl.u32 %v1227, 30
  %v1229 = vshll.u32 %v1228, 30
  %v1230 = vsub.s32 %v1226, %v1229
  %vm1231 = vcmp.lt.s32.totalorder %v1230, 0
  %v1232 = vsub.s32 0, %v1230
  %v1233 = vsel %vm1231, %v1232, %v1230
  %v1234 = vclz %v1233
  %v1235 = vsub.s32 %v1234, 2
  %vm1236 = vcmp.gt.s32.totalorder 0, %v1235
  %v1237 = vsel %vm1236, 0, %v1235
  %v1238 = vsub.s32 32, %v1237
  %v1239 = vshll.u32 %v1230, %v1237
  %v1240 = vshrl.u32 %v1222, %v1238
  %v1241 = vor.u32 %v1239, %v1240
  %v1242 = vsub.s32 4294967266, %v1237
  %v1243 = vadd.s32 %v1242, 127
  %v1244 = vshll.u32 %v1243, 23
  %v1245 = vor.u32 4788187, %v1244
  %v1246 = vand.u32 2147483647, %v1245
  %v1248 = vcvt.s32.f32 %v1241
  %v1249 = vmul.f32 %v1248, %v1246
  %v1250 = vxor.u32 %v1249, 2147483648
  %v1251 = vsel %vm1168, %v1250, %v1249
  %v1252 = vsub.s32 4, %v1228
  %v1253 = vsel %vm1168, %v1252, %v1228
  %v1254 = vsel %vm1167, %v206, %v1251
  %v1255 = vsel %vm1167, 0, %v1253
  %v1256 = vcosq.f32.pop %v1254
  %v1257 = vsinq.f32.pop %v1254
  %vm1258 = vweird.f32 %v206
  %v1259 = vand.u32 %v1255, 3
  %vm1260 = vcmp.lt.s32.totalorder %v1259, 2
  %vm1261 = vcmp.eq.s32.totalorder %v1259, 0
  %v1262 = vxor.u32 %v1257, 2147483648
  %v1263 = vsel %vm1261, %v1256, %v1262
  %vm1264 = vcmp.eq.s32.totalorder %v1259, 2
  %v1265 = vxor.u32 %v1256, 2147483648
  %v1266 = vsel %vm1264, %v1265, %v1257
  %v1267 = vsel %vm1260, %v1263, %v1266
  %v1268 = vsel %vm1258, nan, %v1267
  %v1269 = vand.u32 2147483647, %v211
  %vm1270 = vcmp.le.f32.partialorder %v1269, 0.7853982
  %vm1271 = vcmp.lt.s32.totalorder %v211, 0
  %v1272 = vand.u32 %v211, 2139095040
  %v1273 = vshrl.u32 %v1272, 23
  %v1274 = vsub.s32 %v1273, 127
  %v1275 = vand.u32 2147483647, %v211
  %v1276 = vand.u32 %v1275, 8388607
  %v1277 = vor.u32 %v1276, 8388608
  %v1278 = vsub.s32 0, %v1277
  %v1279 = vadd.s32 %v1274, 1
  %vm1280 = vcmp.gt.s32.totalorder %v1279, 0
  %v1281 = vsel %vm1280, %v1279, 0
  %v1282 = vshrl.u32 %v1281, 5
  %v1283 = vand.u32 %v1281, 31
  %v1284 = vsub.s32 32, %v1283
  %v1285 = vshrl.u32 683565275, %v1284
  %v1286 = vshll.u32 683565275, %v1283
  %v1287 = vshrl.u32 2475754826, %v1284
  %v1288 = vor.u32 %v1286, %v1287
  %v1289 = vshll.u32 2475754826, %v1283
  %v1290 = vshrl.u32 2131351028, %v1284
  %v1291 = vor.u32 %v1289, %v1290
  %v1292 = vshll.u32 2131351028, %v1283
  %v1293 = vshrl.u32 2102212464, %v1284
  %v1294 = vor.u32 %v1292, %v1293
  %v1295 = vshll.u32 2102212464, %v1283
  %v1296 = vshrl.u32 920167782, %v1284
  %v1297 = vor.u32 %v1295, %v1296
  %v1298 = vshll.u32 920167782, %v1283
  %v1299 = vshrl.u32 1326507024, %v1284
  %v1300 = vor.u32 %v1298, %v1299
  %vm1301 = vcmp.lt.s32.totalorder %v1282, 1
  %vm1302 = vcmp.lt.s32.totalorder %v1282, 2
  %vm1303 = vcmp.lt.s32.totalorder %v1282, 3
  %vm1304 = vcmp.lt.s32.totalorder %v1282, 4
  %v1305 = vsel %vm1301, %v1285, %v1288
  %v1306 = vsel %vm1304, %v1294, 2102212464
  %v1307 = vsel %vm1303, %v1291, %v1306
  %v1308 = vsel %vm1302, %v1305, %v1307
  %v1309 = vsel %vm1301, %v1288, %v1291
  %v1310 = vsel %vm1304, %v1297, 920167782
  %v1311 = vsel %vm1303, %v1294, %v1310
  %v1312 = vsel %vm1302, %v1309, %v1311
  %v1313 = vsel %vm1301, %v1291, %v1294
  %v1314 = vsel %vm1304, %v1300, 1326507024
  %v1315 = vsel %vm1303, %v1297, %v1314
  %v1316 = vsel %vm1302, %v1313, %v1315
  %v1317 = vshll.u32 %v1277, 8
  %v1318 = vmul.u32.u64.compose %v1317, %v1316
  %v1319 = vextract.low.u32 %v1318
  %v1320 = vextract.high.u32 %v1318
  %v1321 = vmul.u32.u64.compose %v1317, %v1312
  %v1322 = vextract.low.u32 %v1321
  %v1323 = vextract.high.u32 %v1321
  %v1324 = vmul.u32 %v1317, %v1308
  %v1325 = vadd.s32 %v1320, %v1322
  %vm1326 = vc.u32 %v1320, %v1322
  %v1327 = vadd.s32 %v1323, 1
  %v1328 = vsel %vm1326, %v1327, %v1323
  %v1329 = vadd.s32 %v1324, %v1328
  %v1330 = vadd.s32 %v1329, 536870912
  %v1331 = vshrl.u32 %v1330, 30
  %v1332 = vshll.u32 %v1331, 30
  %v1333 = vsub.s32 %v1329, %v1332
  %vm1334 = vcmp.lt.s32.totalorder %v1333, 0
  %v1335 = vsub.s32 0, %v1333
  %v1336 = vsel %vm1334, %v1335, %v1333
  %v1337 = vclz %v1336
  %v1338 = vsub.s32 %v1337, 2
  %vm1339 = vcmp.gt.s32.totalorder 0, %v1338
  %v1340 = vsel %vm1339, 0, %v1338
  %v1341 = vsub.s32 32, %v1340
  %v1342 = vshll.u32 %v1333, %v1340
  %v1343 = vshrl.u32 %v1325, %v1341
  %v1344 = vor.u32 %v1342, %v1343
  %v1345 = vsub.s32 4294967266, %v1340
  %v1346 = vadd.s32 %v1345, 127
  %v1347 = vshll.u32 %v1346, 23
  %v1348 = vor.u32 4788187, %v1347
  %v1349 = vand.u32 2147483647, %v1348
  %v1351 = vcvt.s32.f32 %v1344
  %v1352 = vmul.f32 %v1351, %v1349
  %v1353 = vxor.u32 %v1352, 2147483648
  %v1354 = vsel %vm1271, %v1353, %v1352
  %v1355 = vsub.s32 4, %v1331
  %v1356 = vsel %vm1271, %v1355, %v1331
  %v1357 = vsel %vm1270, %v211, %v1354
  %v1358 = vsel %vm1270, 0, %v1356
  %v1359 = vcosq.f32.pop %v1357
  %v1360 = vsinq.f32.pop %v1357
  %vm1361 = vweird.f32 %v211
  %v1362 = vand.u32 %v1358, 3
  %vm1363 = vcmp.lt.s32.totalorder %v1362, 2
  %vm1364 = vcmp.eq.s32.totalorder %v1362, 0
  %v1365 = vxor.u32 %v1360, 2147483648
  %v1366 = vsel %vm1364, %v1359, %v1365
  %vm1367 = vcmp.eq.s32.totalorder %v1362, 2
  %v1368 = vxor.u32 %v1359, 2147483648
  %v1369 = vsel %vm1367, %v1368, %v1360
  %v1370 = vsel %vm1363, %v1366, %v1369
  %v1371 = vsel %vm1361, nan, %v1370
  %v1372 = vand.u32 2147483647, %v216
  %vm1373 = vcmp.le.f32.partialorder %v1372, 0.7853982
  %vm1374 = vcmp.lt.s32.totalorder %v216, 0
  %v1375 = vand.u32 %v216, 2139095040
  %v1376 = vshrl.u32 %v1375, 23
  %v1377 = vsub.s32 %v1376, 127
  %v1378 = vand.u32 2147483647, %v216
  %v1379 = vand.u32 %v1378, 8388607
  %v1380 = vor.u32 %v1379, 8388608
  %v1381 = vsub.s32 0, %v1380
  %v1382 = vadd.s32 %v1377, 1
  %vm1383 = vcmp.gt.s32.totalorder %v1382, 0
  %v1384 = vsel %vm1383, %v1382, 0
  %v1385 = vshrl.u32 %v1384, 5
  %v1386 = vand.u32 %v1384, 31
  %v1387 = vsub.s32 32, %v1386
  %v1388 = vshrl.u32 683565275, %v1387
  %v1389 = vshll.u32 683565275, %v1386
  %v1390 = vshrl.u32 2475754826, %v1387
  %v1391 = vor.u32 %v1389, %v1390
  %v1392 = vshll.u32 2475754826, %v1386
  %v1393 = vshrl.u32 2131351028, %v1387
  %v1394 = vor.u32 %v1392, %v1393
  %v1395 = vshll.u32 2131351028, %v1386
  %v1396 = vshrl.u32 2102212464, %v1387
  %v1397 = vor.u32 %v1395, %v1396
  %v1398 = vshll.u32 2102212464, %v1386
  %v1399 = vshrl.u32 920167782, %v1387
  %v1400 = vor.u32 %v1398, %v1399
  %v1401 = vshll.u32 920167782, %v1386
  %v1402 = vshrl.u32 1326507024, %v1387
  %v1403 = vor.u32 %v1401, %v1402
  %vm1404 = vcmp.lt.s32.totalorder %v1385, 1
  %vm1405 = vcmp.lt.s32.totalorder %v1385, 2
  %vm1406 = vcmp.lt.s32.totalorder %v1385, 3
  %vm1407 = vcmp.lt.s32.totalorder %v1385, 4
  %v1408 = vsel %vm1404, %v1388, %v1391
  %v1409 = vsel %vm1407, %v1397, 2102212464
  %v1410 = vsel %vm1406, %v1394, %v1409
  %v1411 = vsel %vm1405, %v1408, %v1410
  %v1412 = vsel %vm1404, %v1391, %v1394
  %v1413 = vsel %vm1407, %v1400, 920167782
  %v1414 = vsel %vm1406, %v1397, %v1413
  %v1415 = vsel %vm1405, %v1412, %v1414
  %v1416 = vsel %vm1404, %v1394, %v1397
  %v1417 = vsel %vm1407, %v1403, 1326507024
  %v1418 = vsel %vm1406, %v1400, %v1417
  %v1419 = vsel %vm1405, %v1416, %v1418
  %v1420 = vshll.u32 %v1380, 8
  %v1421 = vmul.u32.u64.compose %v1420, %v1419
  %v1422 = vextract.low.u32 %v1421
  %v1423 = vextract.high.u32 %v1421
  %v1424 = vmul.u32.u64.compose %v1420, %v1415
  %v1425 = vextract.low.u32 %v1424
  %v1426 = vextract.high.u32 %v1424
  %v1427 = vmul.u32 %v1420, %v1411
  %v1428 = vadd.s32 %v1423, %v1425
  %vm1429 = vc.u32 %v1423, %v1425
  %v1430 = vadd.s32 %v1426, 1
  %v1431 = vsel %vm1429, %v1430, %v1426
  %v1432 = vadd.s32 %v1427, %v1431
  %v1433 = vadd.s32 %v1432, 536870912
  %v1434 = vshrl.u32 %v1433, 30
  %v1435 = vshll.u32 %v1434, 30
  %v1436 = vsub.s32 %v1432, %v1435
  %vm1437 = vcmp.lt.s32.totalorder %v1436, 0
  %v1438 = vsub.s32 0, %v1436
  %v1439 = vsel %vm1437, %v1438, %v1436
  %v1440 = vclz %v1439
  %v1441 = vsub.s32 %v1440, 2
  %vm1442 = vcmp.gt.s32.totalorder 0, %v1441
  %v1443 = vsel %vm1442, 0, %v1441
  %v1444 = vsub.s32 32, %v1443
  %v1445 = vshll.u32 %v1436, %v1443
  %v1446 = vshrl.u32 %v1428, %v1444
  %v1447 = vor.u32 %v1445, %v1446
  %v1448 = vsub.s32 4294967266, %v1443
  %v1449 = vadd.s32 %v1448, 127
  %v1450 = vshll.u32 %v1449, 23
  %v1451 = vor.u32 4788187, %v1450
  %v1452 = vand.u32 2147483647, %v1451
  %v1454 = vcvt.s32.f32 %v1447
  %v1455 = vmul.f32 %v1454, %v1452
  %v1456 = vxor.u32 %v1455, 2147483648
  %v1457 = vsel %vm1374, %v1456, %v1455
  %v1458 = vsub.s32 4, %v1434
  %v1459 = vsel %vm1374, %v1458, %v1434
  %v1460 = vsel %vm1373, %v216, %v1457
  %v1461 = vsel %vm1373, 0, %v1459
  %v1462 = vcosq.f32.pop %v1460
  %v1463 = vsinq.f32.pop %v1460
  %vm1464 = vweird.f32 %v216
  %v1465 = vand.u32 %v1461, 3
  %vm1466 = vcmp.lt.s32.totalorder %v1465, 2
  %vm1467 = vcmp.eq.s32.totalorder %v1465, 0
  %v1468 = vxor.u32 %v1463, 2147483648
  %v1469 = vsel %vm1467, %v1462, %v1468
  %vm1470 = vcmp.eq.s32.totalorder %v1465, 2
  %v1471 = vxor.u32 %v1462, 2147483648
  %v1472 = vsel %vm1470, %v1471, %v1463
  %v1473 = vsel %vm1466, %v1469, %v1472
  %v1474 = vsel %vm1464, nan, %v1473
  %v1475 = vand.u32 2147483647, %v221
  %vm1476 = vcmp.le.f32.partialorder %v1475, 0.7853982
  %vm1477 = vcmp.lt.s32.totalorder %v221, 0
  %v1478 = vand.u32 %v221, 2139095040
  %v1479 = vshrl.u32 %v1478, 23
  %v1480 = vsub.s32 %v1479, 127
  %v1481 = vand.u32 2147483647, %v221
  %v1482 = vand.u32 %v1481, 8388607
  %v1483 = vor.u32 %v1482, 8388608
  %v1484 = vsub.s32 0, %v1483
  %v1485 = vadd.s32 %v1480, 1
  %vm1486 = vcmp.gt.s32.totalorder %v1485, 0
  %v1487 = vsel %vm1486, %v1485, 0
  %v1488 = vshrl.u32 %v1487, 5
  %v1489 = vand.u32 %v1487, 31
  %v1490 = vsub.s32 32, %v1489
  %v1491 = vshrl.u32 683565275, %v1490
  %v1492 = vshll.u32 683565275, %v1489
  %v1493 = vshrl.u32 2475754826, %v1490
  %v1494 = vor.u32 %v1492, %v1493
  %v1495 = vshll.u32 2475754826, %v1489
  %v1496 = vshrl.u32 2131351028, %v1490
  %v1497 = vor.u32 %v1495, %v1496
  %v1498 = vshll.u32 2131351028, %v1489
  %v1499 = vshrl.u32 2102212464, %v1490
  %v1500 = vor.u32 %v1498, %v1499
  %v1501 = vshll.u32 2102212464, %v1489
  %v1502 = vshrl.u32 920167782, %v1490
  %v1503 = vor.u32 %v1501, %v1502
  %v1504 = vshll.u32 920167782, %v1489
  %v1505 = vshrl.u32 1326507024, %v1490
  %v1506 = vor.u32 %v1504, %v1505
  %vm1507 = vcmp.lt.s32.totalorder %v1488, 1
  %vm1508 = vcmp.lt.s32.totalorder %v1488, 2
  %vm1509 = vcmp.lt.s32.totalorder %v1488, 3
  %vm1510 = vcmp.lt.s32.totalorder %v1488, 4
  %v1511 = vsel %vm1507, %v1491, %v1494
  %v1512 = vsel %vm1510, %v1500, 2102212464
  %v1513 = vsel %vm1509, %v1497, %v1512
  %v1514 = vsel %vm1508, %v1511, %v1513
  %v1515 = vsel %vm1507, %v1494, %v1497
  %v1516 = vsel %vm1510, %v1503, 920167782
  %v1517 = vsel %vm1509, %v1500, %v1516
  %v1518 = vsel %vm1508, %v1515, %v1517
  %v1519 = vsel %vm1507, %v1497, %v1500
  %v1520 = vsel %vm1510, %v1506, 1326507024
  %v1521 = vsel %vm1509, %v1503, %v1520
  %v1522 = vsel %vm1508, %v1519, %v1521
  %v1523 = vshll.u32 %v1483, 8
  %v1524 = vmul.u32.u64.compose %v1523, %v1522
  %v1525 = vextract.low.u32 %v1524
  %v1526 = vextract.high.u32 %v1524
  %v1527 = vmul.u32.u64.compose %v1523, %v1518
  %v1528 = vextract.low.u32 %v1527
  %v1529 = vextract.high.u32 %v1527
  %v1530 = vmul.u32 %v1523, %v1514
  %v1531 = vadd.s32 %v1526, %v1528
  %vm1532 = vc.u32 %v1526, %v1528
  %v1533 = vadd.s32 %v1529, 1
  %v1534 = vsel %vm1532, %v1533, %v1529
  %v1535 = vadd.s32 %v1530, %v1534
  %v1536 = vadd.s32 %v1535, 536870912
  %v1537 = vshrl.u32 %v1536, 30
  %v1538 = vshll.u32 %v1537, 30
  %v1539 = vsub.s32 %v1535, %v1538
  %vm1540 = vcmp.lt.s32.totalorder %v1539, 0
  %v1541 = vsub.s32 0, %v1539
  %v1542 = vsel %vm1540, %v1541, %v1539
  %v1543 = vclz %v1542
  %v1544 = vsub.s32 %v1543, 2
  %vm1545 = vcmp.gt.s32.totalorder 0, %v1544
  %v1546 = vsel %vm1545, 0, %v1544
  %v1547 = vsub.s32 32, %v1546
  %v1548 = vshll.u32 %v1539, %v1546
  %v1549 = vshrl.u32 %v1531, %v1547
  %v1550 = vor.u32 %v1548, %v1549
  %v1551 = vsub.s32 4294967266, %v1546
  %v1552 = vadd.s32 %v1551, 127
  %v1553 = vshll.u32 %v1552, 23
  %v1554 = vor.u32 4788187, %v1553
  %v1555 = vand.u32 2147483647, %v1554
  %v1557 = vcvt.s32.f32 %v1550
  %v1558 = vmul.f32 %v1557, %v1555
  %v1559 = vxor.u32 %v1558, 2147483648
  %v1560 = vsel %vm1477, %v1559, %v1558
  %v1561 = vsub.s32 4, %v1537
  %v1562 = vsel %vm1477, %v1561, %v1537
  %v1563 = vsel %vm1476, %v221, %v1560
  %v1564 = vsel %vm1476, 0, %v1562
  %v1565 = vcosq.f32.pop %v1563
  %v1566 = vsinq.f32.pop %v1563
  %vm1567 = vweird.f32 %v221
  %v1568 = vand.u32 %v1564, 3
  %vm1569 = vcmp.lt.s32.totalorder %v1568, 2
  %vm1570 = vcmp.eq.s32.totalorder %v1568, 0
  %v1571 = vxor.u32 %v1566, 2147483648
  %v1572 = vsel %vm1570, %v1565, %v1571
  %vm1573 = vcmp.eq.s32.totalorder %v1568, 2
  %v1574 = vxor.u32 %v1565, 2147483648
  %v1575 = vsel %vm1573, %v1574, %v1566
  %v1576 = vsel %vm1569, %v1572, %v1575
  %v1577 = vsel %vm1567, nan, %v1576
  %v1578 = vand.u32 2147483647, %v226
  %vm1579 = vcmp.le.f32.partialorder %v1578, 0.7853982
  %vm1580 = vcmp.lt.s32.totalorder %v226, 0
  %v1581 = vand.u32 %v226, 2139095040
  %v1582 = vshrl.u32 %v1581, 23
  %v1583 = vsub.s32 %v1582, 127
  %v1584 = vand.u32 2147483647, %v226
  %v1585 = vand.u32 %v1584, 8388607
  %v1586 = vor.u32 %v1585, 8388608
  %v1587 = vsub.s32 0, %v1586
  %v1588 = vadd.s32 %v1583, 1
  %vm1589 = vcmp.gt.s32.totalorder %v1588, 0
  %v1590 = vsel %vm1589, %v1588, 0
  %v1591 = vshrl.u32 %v1590, 5
  %v1592 = vand.u32 %v1590, 31
  %v1593 = vsub.s32 32, %v1592
  %v1594 = vshrl.u32 683565275, %v1593
  %v1595 = vshll.u32 683565275, %v1592
  %v1596 = vshrl.u32 2475754826, %v1593
  %v1597 = vor.u32 %v1595, %v1596
  %v1598 = vshll.u32 2475754826, %v1592
  %v1599 = vshrl.u32 2131351028, %v1593
  %v1600 = vor.u32 %v1598, %v1599
  %v1601 = vshll.u32 2131351028, %v1592
  %v1602 = vshrl.u32 2102212464, %v1593
  %v1603 = vor.u32 %v1601, %v1602
  %v1604 = vshll.u32 2102212464, %v1592
  %v1605 = vshrl.u32 920167782, %v1593
  %v1606 = vor.u32 %v1604, %v1605
  %v1607 = vshll.u32 920167782, %v1592
  %v1608 = vshrl.u32 1326507024, %v1593
  %v1609 = vor.u32 %v1607, %v1608
  %vm1610 = vcmp.lt.s32.totalorder %v1591, 1
  %vm1611 = vcmp.lt.s32.totalorder %v1591, 2
  %vm1612 = vcmp.lt.s32.totalorder %v1591, 3
  %vm1613 = vcmp.lt.s32.totalorder %v1591, 4
  %v1614 = vsel %vm1610, %v1594, %v1597
  %v1615 = vsel %vm1613, %v1603, 2102212464
  %v1616 = vsel %vm1612, %v1600, %v1615
  %v1617 = vsel %vm1611, %v1614, %v1616
  %v1618 = vsel %vm1610, %v1597, %v1600
  %v1619 = vsel %vm1613, %v1606, 920167782
  %v1620 = vsel %vm1612, %v1603, %v1619
  %v1621 = vsel %vm1611, %v1618, %v1620
  %v1622 = vsel %vm1610, %v1600, %v1603
  %v1623 = vsel %vm1613, %v1609, 1326507024
  %v1624 = vsel %vm1612, %v1606, %v1623
  %v1625 = vsel %vm1611, %v1622, %v1624
  %v1626 = vshll.u32 %v1586, 8
  %v1627 = vmul.u32.u64.compose %v1626, %v1625
  %v1628 = vextract.low.u32 %v1627
  %v1629 = vextract.high.u32 %v1627
  %v1630 = vmul.u32.u64.compose %v1626, %v1621
  %v1631 = vextract.low.u32 %v1630
  %v1632 = vextract.high.u32 %v1630
  %v1633 = vmul.u32 %v1626, %v1617
  %v1634 = vadd.s32 %v1629, %v1631
  %vm1635 = vc.u32 %v1629, %v1631
  %v1636 = vadd.s32 %v1632, 1
  %v1637 = vsel %vm1635, %v1636, %v1632
  %v1638 = vadd.s32 %v1633, %v1637
  %v1639 = vadd.s32 %v1638, 536870912
  %v1640 = vshrl.u32 %v1639, 30
  %v1641 = vshll.u32 %v1640, 30
  %v1642 = vsub.s32 %v1638, %v1641
  %vm1643 = vcmp.lt.s32.totalorder %v1642, 0
  %v1644 = vsub.s32 0, %v1642
  %v1645 = vsel %vm1643, %v1644, %v1642
  %v1646 = vclz %v1645
  %v1647 = vsub.s32 %v1646, 2
  %vm1648 = vcmp.gt.s32.totalorder 0, %v1647
  %v1649 = vsel %vm1648, 0, %v1647
  %v1650 = vsub.s32 32, %v1649
  %v1651 = vshll.u32 %v1642, %v1649
  %v1652 = vshrl.u32 %v1634, %v1650
  %v1653 = vor.u32 %v1651, %v1652
  %v1654 = vsub.s32 4294967266, %v1649
  %v1655 = vadd.s32 %v1654, 127
  %v1656 = vshll.u32 %v1655, 23
  %v1657 = vor.u32 4788187, %v1656
  %v1658 = vand.u32 2147483647, %v1657
  %v1660 = vcvt.s32.f32 %v1653
  %v1661 = vmul.f32 %v1660, %v1658
  %v1662 = vxor.u32 %v1661, 2147483648
  %v1663 = vsel %vm1580, %v1662, %v1661
  %v1664 = vsub.s32 4, %v1640
  %v1665 = vsel %vm1580, %v1664, %v1640
  %v1666 = vsel %vm1579, %v226, %v1663
  %v1667 = vsel %vm1579, 0, %v1665
  %v1668 = vcosq.f32.pop %v1666
  %v1669 = vsinq.f32.pop %v1666
  %vm1670 = vweird.f32 %v226
  %v1671 = vand.u32 %v1667, 3
  %vm1672 = vcmp.lt.s32.totalorder %v1671, 2
  %vm1673 = vcmp.eq.s32.totalorder %v1671, 0
  %v1674 = vxor.u32 %v1669, 2147483648
  %v1675 = vsel %vm1673, %v1668, %v1674
  %vm1676 = vcmp.eq.s32.totalorder %v1671, 2
  %v1677 = vxor.u32 %v1668, 2147483648
  %v1678 = vsel %vm1676, %v1677, %v1669
  %v1679 = vsel %vm1672, %v1675, %v1678
  %v1680 = vsel %vm1670, nan, %v1679
  %v1681 = vand.u32 2147483647, %v231
  %vm1682 = vcmp.le.f32.partialorder %v1681, 0.7853982
  %vm1683 = vcmp.lt.s32.totalorder %v231, 0
  %v1684 = vand.u32 %v231, 2139095040
  %v1685 = vshrl.u32 %v1684, 23
  %v1686 = vsub.s32 %v1685, 127
  %v1687 = vand.u32 2147483647, %v231
  %v1688 = vand.u32 %v1687, 8388607
  %v1689 = vor.u32 %v1688, 8388608
  %v1690 = vsub.s32 0, %v1689
  %v1691 = vadd.s32 %v1686, 1
  %vm1692 = vcmp.gt.s32.totalorder %v1691, 0
  %v1693 = vsel %vm1692, %v1691, 0
  %v1694 = vshrl.u32 %v1693, 5
  %v1695 = vand.u32 %v1693, 31
  %v1696 = vsub.s32 32, %v1695
  %v1697 = vshrl.u32 683565275, %v1696
  %v1698 = vshll.u32 683565275, %v1695
  %v1699 = vshrl.u32 2475754826, %v1696
  %v1700 = vor.u32 %v1698, %v1699
  %v1701 = vshll.u32 2475754826, %v1695
  %v1702 = vshrl.u32 2131351028, %v1696
  %v1703 = vor.u32 %v1701, %v1702
  %v1704 = vshll.u32 2131351028, %v1695
  %v1705 = vshrl.u32 2102212464, %v1696
  %v1706 = vor.u32 %v1704, %v1705
  %v1707 = vshll.u32 2102212464, %v1695
  %v1708 = vshrl.u32 920167782, %v1696
  %v1709 = vor.u32 %v1707, %v1708
  %v1710 = vshll.u32 920167782, %v1695
  %v1711 = vshrl.u32 1326507024, %v1696
  %v1712 = vor.u32 %v1710, %v1711
  %vm1713 = vcmp.lt.s32.totalorder %v1694, 1
  %vm1714 = vcmp.lt.s32.totalorder %v1694, 2
  %vm1715 = vcmp.lt.s32.totalorder %v1694, 3
  %vm1716 = vcmp.lt.s32.totalorder %v1694, 4
  %v1717 = vsel %vm1713, %v1697, %v1700
  %v1718 = vsel %vm1716, %v1706, 2102212464
  %v1719 = vsel %vm1715, %v1703, %v1718
  %v1720 = vsel %vm1714, %v1717, %v1719
  %v1721 = vsel %vm1713, %v1700, %v1703
  %v1722 = vsel %vm1716, %v1709, 920167782
  %v1723 = vsel %vm1715, %v1706, %v1722
  %v1724 = vsel %vm1714, %v1721, %v1723
  %v1725 = vsel %vm1713, %v1703, %v1706
  %v1726 = vsel %vm1716, %v1712, 1326507024
  %v1727 = vsel %vm1715, %v1709, %v1726
  %v1728 = vsel %vm1714, %v1725, %v1727
  %v1729 = vshll.u32 %v1689, 8
  %v1730 = vmul.u32.u64.compose %v1729, %v1728
  %v1731 = vextract.low.u32 %v1730
  %v1732 = vextract.high.u32 %v1730
  %v1733 = vmul.u32.u64.compose %v1729, %v1724
  %v1734 = vextract.low.u32 %v1733
  %v1735 = vextract.high.u32 %v1733
  %v1736 = vmul.u32 %v1729, %v1720
  %v1737 = vadd.s32 %v1732, %v1734
  %vm1738 = vc.u32 %v1732, %v1734
  %v1739 = vadd.s32 %v1735, 1
  %v1740 = vsel %vm1738, %v1739, %v1735
  %v1741 = vadd.s32 %v1736, %v1740
  %v1742 = vadd.s32 %v1741, 536870912
  %v1743 = vshrl.u32 %v1742, 30
  %v1744 = vshll.u32 %v1743, 30
  %v1745 = vsub.s32 %v1741, %v1744
  %vm1746 = vcmp.lt.s32.totalorder %v1745, 0
  %v1747 = vsub.s32 0, %v1745
  %v1748 = vsel %vm1746, %v1747, %v1745
  %v1749 = vclz %v1748
  %v1750 = vsub.s32 %v1749, 2
  %vm1751 = vcmp.gt.s32.totalorder 0, %v1750
  %v1752 = vsel %vm1751, 0, %v1750
  %v1753 = vsub.s32 32, %v1752
  %v1754 = vshll.u32 %v1745, %v1752
  %v1755 = vshrl.u32 %v1737, %v1753
  %v1756 = vor.u32 %v1754, %v1755
  %v1757 = vsub.s32 4294967266, %v1752
  %v1758 = vadd.s32 %v1757, 127
  %v1759 = vshll.u32 %v1758, 23
  %v1760 = vor.u32 4788187, %v1759
  %v1761 = vand.u32 2147483647, %v1760
  %v1763 = vcvt.s32.f32 %v1756
  %v1764 = vmul.f32 %v1763, %v1761
  %v1765 = vxor.u32 %v1764, 2147483648
  %v1766 = vsel %vm1683, %v1765, %v1764
  %v1767 = vsub.s32 4, %v1743
  %v1768 = vsel %vm1683, %v1767, %v1743
  %v1769 = vsel %vm1682, %v231, %v1766
  %v1770 = vsel %vm1682, 0, %v1768
  %v1771 = vcosq.f32.pop %v1769
  %v1772 = vsinq.f32.pop %v1769
  %vm1773 = vweird.f32 %v231
  %v1774 = vand.u32 %v1770, 3
  %vm1775 = vcmp.lt.s32.totalorder %v1774, 2
  %vm1776 = vcmp.eq.s32.totalorder %v1774, 0
  %v1777 = vxor.u32 %v1772, 2147483648
  %v1778 = vsel %vm1776, %v1771, %v1777
  %vm1779 = vcmp.eq.s32.totalorder %v1774, 2
  %v1780 = vxor.u32 %v1771, 2147483648
  %v1781 = vsel %vm1779, %v1780, %v1772
  %v1782 = vsel %vm1775, %v1778, %v1781
  %v1783 = vsel %vm1773, nan, %v1782
  %v1784 = vand.u32 2147483647, %v236
  %vm1785 = vcmp.le.f32.partialorder %v1784, 0.7853982
  %vm1786 = vcmp.lt.s32.totalorder %v236, 0
  %v1787 = vand.u32 %v236, 2139095040
  %v1788 = vshrl.u32 %v1787, 23
  %v1789 = vsub.s32 %v1788, 127
  %v1790 = vand.u32 2147483647, %v236
  %v1791 = vand.u32 %v1790, 8388607
  %v1792 = vor.u32 %v1791, 8388608
  %v1793 = vsub.s32 0, %v1792
  %v1794 = vadd.s32 %v1789, 1
  %vm1795 = vcmp.gt.s32.totalorder %v1794, 0
  %v1796 = vsel %vm1795, %v1794, 0
  %v1797 = vshrl.u32 %v1796, 5
  %v1798 = vand.u32 %v1796, 31
  %v1799 = vsub.s32 32, %v1798
  %v1800 = vshrl.u32 683565275, %v1799
  %v1801 = vshll.u32 683565275, %v1798
  %v1802 = vshrl.u32 2475754826, %v1799
  %v1803 = vor.u32 %v1801, %v1802
  %v1804 = vshll.u32 2475754826, %v1798
  %v1805 = vshrl.u32 2131351028, %v1799
  %v1806 = vor.u32 %v1804, %v1805
  %v1807 = vshll.u32 2131351028, %v1798
  %v1808 = vshrl.u32 2102212464, %v1799
  %v1809 = vor.u32 %v1807, %v1808
  %v1810 = vshll.u32 2102212464, %v1798
  %v1811 = vshrl.u32 920167782, %v1799
  %v1812 = vor.u32 %v1810, %v1811
  %v1813 = vshll.u32 920167782, %v1798
  %v1814 = vshrl.u32 1326507024, %v1799
  %v1815 = vor.u32 %v1813, %v1814
  %vm1816 = vcmp.lt.s32.totalorder %v1797, 1
  %vm1817 = vcmp.lt.s32.totalorder %v1797, 2
  %vm1818 = vcmp.lt.s32.totalorder %v1797, 3
  %vm1819 = vcmp.lt.s32.totalorder %v1797, 4
  %v1820 = vsel %vm1816, %v1800, %v1803
  %v1821 = vsel %vm1819, %v1809, 2102212464
  %v1822 = vsel %vm1818, %v1806, %v1821
  %v1823 = vsel %vm1817, %v1820, %v1822
  %v1824 = vsel %vm1816, %v1803, %v1806
  %v1825 = vsel %vm1819, %v1812, 920167782
  %v1826 = vsel %vm1818, %v1809, %v1825
  %v1827 = vsel %vm1817, %v1824, %v1826
  %v1828 = vsel %vm1816, %v1806, %v1809
  %v1829 = vsel %vm1819, %v1815, 1326507024
  %v1830 = vsel %vm1818, %v1812, %v1829
  %v1831 = vsel %vm1817, %v1828, %v1830
  %v1832 = vshll.u32 %v1792, 8
  %v1833 = vmul.u32.u64.compose %v1832, %v1831
  %v1834 = vextract.low.u32 %v1833
  %v1835 = vextract.high.u32 %v1833
  %v1836 = vmul.u32.u64.compose %v1832, %v1827
  %v1837 = vextract.low.u32 %v1836
  %v1838 = vextract.high.u32 %v1836
  %v1839 = vmul.u32 %v1832, %v1823
  %v1840 = vadd.s32 %v1835, %v1837
  %vm1841 = vc.u32 %v1835, %v1837
  %v1842 = vadd.s32 %v1838, 1
  %v1843 = vsel %vm1841, %v1842, %v1838
  %v1844 = vadd.s32 %v1839, %v1843
  %v1845 = vadd.s32 %v1844, 536870912
  %v1846 = vshrl.u32 %v1845, 30
  %v1847 = vshll.u32 %v1846, 30
  %v1848 = vsub.s32 %v1844, %v1847
  %vm1849 = vcmp.lt.s32.totalorder %v1848, 0
  %v1850 = vsub.s32 0, %v1848
  %v1851 = vsel %vm1849, %v1850, %v1848
  %v1852 = vclz %v1851
  %v1853 = vsub.s32 %v1852, 2
  %vm1854 = vcmp.gt.s32.totalorder 0, %v1853
  %v1855 = vsel %vm1854, 0, %v1853
  %v1856 = vsub.s32 32, %v1855
  %v1857 = vshll.u32 %v1848, %v1855
  %v1858 = vshrl.u32 %v1840, %v1856
  %v1859 = vor.u32 %v1857, %v1858
  %v1860 = vsub.s32 4294967266, %v1855
  %v1861 = vadd.s32 %v1860, 127
  %v1862 = vshll.u32 %v1861, 23
  %v1863 = vor.u32 4788187, %v1862
  %v1864 = vand.u32 2147483647, %v1863
  %v1866 = vcvt.s32.f32 %v1859
  %v1867 = vmul.f32 %v1866, %v1864
  %v1868 = vxor.u32 %v1867, 2147483648
  %v1869 = vsel %vm1786, %v1868, %v1867
  %v1870 = vsub.s32 4, %v1846
  %v1871 = vsel %vm1786, %v1870, %v1846
  %v1872 = vsel %vm1785, %v236, %v1869
  %v1873 = vsel %vm1785, 0, %v1871
  %v1874 = vcosq.f32.pop %v1872
  %v1875 = vsinq.f32.pop %v1872
  %vm1876 = vweird.f32 %v236
  %v1877 = vand.u32 %v1873, 3
  %vm1878 = vcmp.lt.s32.totalorder %v1877, 2
  %vm1879 = vcmp.eq.s32.totalorder %v1877, 0
  %v1880 = vxor.u32 %v1875, 2147483648
  %v1881 = vsel %vm1879, %v1874, %v1880
  %vm1882 = vcmp.eq.s32.totalorder %v1877, 2
  %v1883 = vxor.u32 %v1874, 2147483648
  %v1884 = vsel %vm1882, %v1883, %v1875
  %v1885 = vsel %vm1878, %v1881, %v1884
  %v1886 = vsel %vm1876, nan, %v1885
  %v1887 = vld [vmem:[%s3] sm:$0xff]
  %v1888 = vld [vmem:[%s3 + $0x8] sm:$0xff]
  %v1889 = vld [vmem:[%s3 + $0x10] sm:$0xff]
  %v1890 = vld [vmem:[%s3 + $0x18] sm:$0xff]
  %v1891 = vld [vmem:[%s4] sm:$0x1]
  %v1893 = vlaneseq
  %v1894 = vshrl.u32 %v1893, 7
  %v1895 = vsub.s32 0, %v1894
  %v1896 = vrot.slane %v1891, %v1895
  %vm1898 = vcmask 261120
  %v1900 = vsel %vm1898, %v341, 0
  %v1903 = vsel %vm1898, %v444, 0
  %v1906 = vsel %vm1898, %v547, 0
  %v1909 = vsel %vm1898, %v650, 0
  %v1912 = vsel %vm1898, %v753, 0
  %v1915 = vsel %vm1898, %v856, 0
  %v1918 = vsel %vm1898, %v959, 0
  %v1921 = vsel %vm1898, %v1062, 0
  %v1924 = vsel %vm1898, %v1165, 0
  %v1927 = vsel %vm1898, %v1268, 0
  %v1930 = vsel %vm1898, %v1371, 0
  %v1933 = vsel %vm1898, %v1474, 0
  %v1936 = vsel %vm1898, %v1577, 0
  %v1939 = vsel %vm1898, %v1680, 0
  %v1942 = vsel %vm1898, %v1783, 0
  %v1945 = vsel %vm1898, %v1886, 0
  %1947 = vmatprep.subr.mxu0 0.0
  %1948 = vmatpush1.msra.mxu0 0.0
  %1949 = vmatprep.subr.mxu0 0.0
  %1950 = vmatpush1.msra.mxu0 0.0
  %1951 = vmatprep.subr.mxu0 0.0
  %1952 = vmatpush1.msra.mxu0 0.0
  %1953 = vmatprep.subr.mxu0 0.0
  %1954 = vmatpush1.msra.mxu0 0.0
  %1955 = vmatprep.subr.mxu0 0.0
  %1956 = vmatpush1.msra.mxu0 0.0
  %1957 = vmatprep.subr.mxu0 0.0
  %1958 = vmatpush1.msra.mxu0 0.0
  %1959 = vmatprep.subr.mxu0 0.0
  %1960 = vmatpush1.msra.mxu0 0.0
  %1961 = vmatprep.subr.mxu0 0.0
  %1962 = vmatpush1.msra.mxu0 0.0
  %1963 = vmatprep.subr.mxu0 0.0
  %1964 = vmatpush1.msra.mxu0 0.0
  %1965 = vmatprep.subr.mxu0 0.0
  %1966 = vmatpush1.msra.mxu0 0.0
  %1967 = vmatprep.subr.mxu0 0.0
  %1968 = vmatpush1.msra.mxu0 0.0
  %1969 = vmatprep.subr.mxu0 0.0
  %1970 = vmatpush1.msra.mxu0 0.0
  %1971 = vmatprep.subr.mxu0 0.0
  %1972 = vmatpush1.msra.mxu0 %v1890
  %1973 = vmatprep.subr.mxu0 0.0
  %1974 = vmatpush1.msra.mxu0 %v1889
  %1975 = vmatprep.subr.mxu0 0.0
  %1976 = vmatpush1.msra.mxu0 %v1888
  %1977 = vmatprep.subr.mxu0 0.0
  %1978 = vmatpush1.msra.mxu0 %v1887
  %1979 = vmatprep.subr.mxu0 0.0
  %1980 = vmatpush2.msra.mxu0 0.0
  %1981 = vmatprep.subr.mxu0 0.0
  %1982 = vmatpush2.msra.mxu0 0.0
  %1983 = vmatprep.subr.mxu0 0.0
  %1984 = vmatpush2.msra.mxu0 0.0
  %1985 = vmatprep.subr.mxu0 0.0
  %1986 = vmatpush2.msra.mxu0 0.0
  %1987 = vmatprep.subr.mxu0 0.0
  %1988 = vmatpush2.msra.mxu0 0.0
  %1989 = vmatprep.subr.mxu0 0.0
  %1990 = vmatpush2.msra.mxu0 0.0
  %1991 = vmatprep.subr.mxu0 0.0
  %1992 = vmatpush2.msra.mxu0 0.0
  %1993 = vmatprep.subr.mxu0 0.0
  %1994 = vmatpush2.msra.mxu0 0.0
  %1995 = vmatprep.subr.mxu0 0.0
  %1996 = vmatpush2.msra.mxu0 0.0
  %1997 = vmatprep.subr.mxu0 0.0
  %1998 = vmatpush2.msra.mxu0 0.0
  %1999 = vmatprep.subr.mxu0 0.0
  %2000 = vmatpush2.msra.mxu0 0.0
  %2001 = vmatprep.subr.mxu0 0.0
  %2002 = vmatpush2.msra.mxu0 0.0
  %2003 = vmatprep.subr.mxu0 0.0
  %2004 = vmatpush2.msra.mxu0 0.0
  %2005 = vmatprep.subr.mxu0 0.0
  %2006 = vmatpush2.msra.mxu0 0.0
  %2007 = vmatprep.subr.mxu0 0.0
  %2008 = vmatpush2.msra.mxu0 0.0
  %2009 = vmatprep.subr.mxu0 0.0
  %2010 = vmatpush2.msra.mxu0 0.0
  %2011 = vmatprep.mubr.f32.mxu0 0.0
  %2012 = vmatmul.mubr.f32.gmra.mxu0 %v1900
  %v2013 = vpop.f32.mrf.mxu0
  %v2014 = vadd.f32 %v1896, %v2013
  %v2015 = vpop.f32.mrf.mxu0
  %2016 = vmatprep.mubr.f32.mxu0 0.0
  %2017 = vmatmul.mubr.f32.gmra.mxu0 %v1903
  %v2018 = vpop.f32.mrf.mxu0
  %v2019 = vadd.f32 %v1896, %v2018
  %v2020 = vpop.f32.mrf.mxu0
  %2021 = vmatprep.mubr.f32.mxu0 0.0
  %2022 = vmatmul.mubr.f32.gmra.mxu0 %v1906
  %v2023 = vpop.f32.mrf.mxu0
  %v2024 = vadd.f32 %v1896, %v2023
  %v2025 = vpop.f32.mrf.mxu0
  %2026 = vmatprep.mubr.f32.mxu0 0.0
  %2027 = vmatmul.mubr.f32.gmra.mxu0 %v1909
  %v2028 = vpop.f32.mrf.mxu0
  %v2029 = vadd.f32 %v1896, %v2028
  %v2030 = vpop.f32.mrf.mxu0
  %2031 = vmatprep.mubr.f32.mxu0 0.0
  %2032 = vmatmul.mubr.f32.gmra.mxu0 %v1912
  %v2033 = vpop.f32.mrf.mxu0
  %v2034 = vadd.f32 %v1896, %v2033
  %v2035 = vpop.f32.mrf.mxu0
  %2036 = vmatprep.mubr.f32.mxu0 0.0
  %2037 = vmatmul.mubr.f32.gmra.mxu0 %v1915
  %v2038 = vpop.f32.mrf.mxu0
  %v2039 = vadd.f32 %v1896, %v2038
  %v2040 = vpop.f32.mrf.mxu0
  %2041 = vmatprep.mubr.f32.mxu0 0.0
  %2042 = vmatmul.mubr.f32.gmra.mxu0 %v1918
  %v2043 = vpop.f32.mrf.mxu0
  %v2044 = vadd.f32 %v1896, %v2043
  %v2045 = vpop.f32.mrf.mxu0
  %2046 = vmatprep.mubr.f32.mxu0 0.0
  %2047 = vmatmul.mubr.f32.gmra.mxu0 %v1921
  %v2048 = vpop.f32.mrf.mxu0
  %v2049 = vadd.f32 %v1896, %v2048
  %v2050 = vpop.f32.mrf.mxu0
  %2051 = vmatprep.mubr.f32.mxu0 0.0
  %2052 = vmatmul.mubr.f32.gmra.mxu0 %v1924
  %v2053 = vpop.f32.mrf.mxu0
  %v2054 = vadd.f32 %v1896, %v2053
  %v2055 = vpop.f32.mrf.mxu0
  %2056 = vmatprep.mubr.f32.mxu0 0.0
  %2057 = vmatmul.mubr.f32.gmra.mxu0 %v1927
  %v2058 = vpop.f32.mrf.mxu0
  %v2059 = vadd.f32 %v1896, %v2058
  %v2060 = vpop.f32.mrf.mxu0
  %2061 = vmatprep.mubr.f32.mxu0 0.0
  %2062 = vmatmul.mubr.f32.gmra.mxu0 %v1930
  %v2063 = vpop.f32.mrf.mxu0
  %v2064 = vadd.f32 %v1896, %v2063
  %v2065 = vpop.f32.mrf.mxu0
  %2066 = vmatprep.mubr.f32.mxu0 0.0
  %2067 = vmatmul.mubr.f32.gmra.mxu0 %v1933
  %v2068 = vpop.f32.mrf.mxu0
  %v2069 = vadd.f32 %v1896, %v2068
  %v2070 = vpop.f32.mrf.mxu0
  %2071 = vmatprep.mubr.f32.mxu0 0.0
  %2072 = vmatmul.mubr.f32.gmra.mxu0 %v1936
  %v2073 = vpop.f32.mrf.mxu0
  %v2074 = vadd.f32 %v1896, %v2073
  %v2075 = vpop.f32.mrf.mxu0
  %2076 = vmatprep.mubr.f32.mxu0 0.0
  %2077 = vmatmul.mubr.f32.gmra.mxu0 %v1939
  %v2078 = vpop.f32.mrf.mxu0
  %v2079 = vadd.f32 %v1896, %v2078
  %v2080 = vpop.f32.mrf.mxu0
  %2081 = vmatprep.mubr.f32.mxu0 0.0
  %2082 = vmatmul.mubr.f32.gmra.mxu0 %v1942
  %v2083 = vpop.f32.mrf.mxu0
  %v2084 = vadd.f32 %v1896, %v2083
  %v2085 = vpop.f32.mrf.mxu0
  %2086 = vmatprep.mubr.f32.mxu0 0.0
  %2087 = vmatmul.mubr.f32.gmra.mxu0 %v1945
  %v2088 = vpop.f32.mrf.mxu0
  %v2089 = vadd.f32 %v1896, %v2088
  %v2090 = vpop.f32.mrf.mxu0
  %2091 = vdwg.mxu0
  %2092 = vst.msk [vmem:[%s5] sm:$0xff] %vm1898, %v2014
  %2093 = vst.msk [vmem:[%s5 + $0x8] sm:$0xff] %vm1898, %v2019
  %2094 = vst.msk [vmem:[%s5 + $0x10] sm:$0xff] %vm1898, %v2024
  %2095 = vst.msk [vmem:[%s5 + $0x18] sm:$0xff] %vm1898, %v2029
  %2096 = vst.msk [vmem:[%s5 + $0x20] sm:$0xff] %vm1898, %v2034
  %2097 = vst.msk [vmem:[%s5 + $0x28] sm:$0xff] %vm1898, %v2039
  %2098 = vst.msk [vmem:[%s5 + $0x30] sm:$0xff] %vm1898, %v2044
  %2099 = vst.msk [vmem:[%s5 + $0x38] sm:$0xff] %vm1898, %v2049
  %2100 = vst.msk [vmem:[%s5 + $0x40] sm:$0xff] %vm1898, %v2054
  %2101 = vst.msk [vmem:[%s5 + $0x48] sm:$0xff] %vm1898, %v2059
  %2102 = vst.msk [vmem:[%s5 + $0x50] sm:$0xff] %vm1898, %v2064
  %2103 = vst.msk [vmem:[%s5 + $0x58] sm:$0xff] %vm1898, %v2069
  %2104 = vst.msk [vmem:[%s5 + $0x60] sm:$0xff] %vm1898, %v2074
  %2105 = vst.msk [vmem:[%s5 + $0x68] sm:$0xff] %vm1898, %v2079
  %2106 = vst.msk [vmem:[%s5 + $0x70] sm:$0xff] %vm1898, %v2084
  %2107 = vst.msk [vmem:[%s5 + $0x78] sm:$0xff] %vm1898, %v2089
  // Predicated region
  $region22: #{tpu_custom_call.1} parent=0 // pred_check
    _
  $region23: #{tpu_custom_call.1} parent=0 // pred_check_branch
    %2109 = sbr.rel (0) target = $region25
  $region24: #{tpu_custom_call.1} parent=0 // pred_region
    _
  $region25: #{tpu_custom_call.1} parent=0 // pred_fallthru
    _
  // Predicated region
  $region26: #{tpu_custom_call.1} parent=0 // pred_check
    _
  $region27: #{tpu_custom_call.1} parent=0 // pred_check_branch
    %2111 = sbr.rel (0) target = $region29
  $region28: #{tpu_custom_call.1} parent=0 // pred_region
    _
  $region29: #{tpu_custom_call.1} parent=0 // pred_fallthru
    _

</llo_original>
